<compile_context>
chip_gen: v5e
topology: v5e:2x2
jax: 0.10.0
libtpu: 0.0.40
codegen_flags: <defaults>
</compile_context>

<pallas_src>
import functools
import math

import jax
import jax.numpy as jnp
from jax.experimental import pallas as pl
from jax.experimental.pallas import tpu as pltpu

LANE = 128


def _round_up(n, m):
    return ((n + m - 1) // m) * m


def _pad2(a, rows, cols):
    return jnp.pad(a, ((0, rows - a.shape[0]), (0, cols - a.shape[1])))


# ---------------------------------------------------------------------------
# Kernels: one HGNN_conv layer,  out_rows(i) = sum_k G[i, k] @ (x[k] @ W + b)
# ---------------------------------------------------------------------------
def _conv_kernel(g_ref, x_ref, w_ref, b_ref, o_ref, acc_ref):
    k = pl.program_id(1)

    @pl.when(k == 0)
    def _():
        acc_ref[...] = jnp.zeros_like(acc_ref)

    # (tk, F) @ (F, O) in bf16 -> f32, add bias, feed the MXU again in bf16.
    xw = jnp.dot(x_ref[...], w_ref[...], preferred_element_type=jnp.float32)
    xw = xw + b_ref[...]
    acc_ref[...] += jnp.dot(
        g_ref[...], xw.astype(jnp.bfloat16), preferred_element_type=jnp.float32
    )

    @pl.when(k == pl.num_programs(1) - 1)
    def _():
        o_ref[...] = acc_ref[...].astype(o_ref.dtype)


def _conv_relu_dropout_kernel(g_ref, x_ref, w_ref, b_ref, mask_ref, o_ref, acc_ref):
    k = pl.program_id(1)

    @pl.when(k == 0)
    def _():
        acc_ref[...] = jnp.zeros_like(acc_ref)

    xw = jnp.dot(x_ref[...], w_ref[...], preferred_element_type=jnp.float32)
    xw = xw + b_ref[...]
    acc_ref[...] += jnp.dot(
        g_ref[...], xw.astype(jnp.bfloat16), preferred_element_type=jnp.float32
    )

    @pl.when(k == pl.num_programs(1) - 1)
    def _():
        h = jnp.maximum(acc_ref[...], 0.0)                       # ReLU
        o_ref[...] = (h * mask_ref[...]).astype(o_ref.dtype)     # dropout: mask is {0, 1/(1-p)}


def _hgnn_conv(g, x, w, b, mask, *, out_dtype, tm, tk, vmem_limit_bytes):
    """out = G @ (x @ W + b), optionally followed by relu + dropout (when mask is given)."""
    n_pad = g.shape[0]
    f_pad = x.shape[1]
    o_pad = w.shape[1]
    grid = (n_pad // tm, n_pad // tk)

    in_specs = [
        pl.BlockSpec((tm, tk), lambda i, k: (i, k)),         # G row/col tile (streamed)
        pl.BlockSpec((tk, f_pad), lambda i, k: (k, 0)),      # x rows for this reduction tile
        pl.BlockSpec((f_pad, o_pad), lambda i, k: (0, 0)),   # W  (constant block -> resident)
        pl.BlockSpec((1, o_pad), lambda i, k: (0, 0)),       # b  (constant block -> resident)
    ]
    args = [g, x, w, b]
    if mask is None:
        kernel = _conv_kernel
    else:
        in_specs.append(pl.BlockSpec((tm, o_pad), lambda i, k: (i, 0)))  # dropout mask row tile
        args.append(mask)
        kernel = _conv_relu_dropout_kernel

    return pl.pallas_call(
        kernel,
        out_shape=jax.ShapeDtypeStruct((n_pad, o_pad), out_dtype),
        grid=grid,
        in_specs=in_specs,
        out_specs=pl.BlockSpec((tm, o_pad), lambda i, k: (i, 0)),
        scratch_shapes=[pltpu.VMEM((tm, o_pad), jnp.float32)],
        compiler_params=pltpu.CompilerParams(
            dimension_semantics=("parallel", "arbitrary"),
            vmem_limit_bytes=vmem_limit_bytes,
        ),
    )(*args)


def hgnn_forward(x, G, w1, b1, w2, b2, dropout_mask, *, tile=None):
    """Full HGNN forward. dropout_mask is (N, n_hid) float32 holding 0 or 1/(1-p)."""
    n, in_ch = x.shape
    n_hid = w1.shape[1]
    n_class = w2.shape[1]

    n_pad = _round_up(n, LANE)
    if tile is None:
        tile = max(t for t in (512, 256, 128) if n_pad % t == 0)
    in_pad = _round_up(in_ch, LANE)
    hid_pad = _round_up(n_hid, LANE)
    cls_pad = _round_up(n_class, LANE)

    gp = _pad2(G, n_pad, n_pad).astype(jnp.bfloat16)
    xp = _pad2(x, n_pad, in_pad).astype(jnp.bfloat16)
    w1p = _pad2(w1, in_pad, hid_pad).astype(jnp.bfloat16)
    b1p = _pad2(b1.reshape(1, -1).astype(jnp.float32), 1, hid_pad)
    w2p = _pad2(w2, hid_pad, cls_pad).astype(jnp.bfloat16)
    b2p = _pad2(b2.reshape(1, -1).astype(jnp.float32), 1, cls_pad)
    maskp = _pad2(dropout_mask.astype(jnp.float32), n_pad, hid_pad)

    vmem_limit = 48 * 1024 * 1024  # under physical VMEM on v5e/v6e/v7x, above default scoped

    # Layer 1: h1 = dropout(relu(G @ (x @ W1 + b1)))  — bf16 output feeds layer 2 directly.
    h1 = _hgnn_conv(gp, xp, w1p, b1p, maskp,
                    out_dtype=jnp.bfloat16, tm=tile, tk=tile, vmem_limit_bytes=vmem_limit)
    # Layer 2: out = G @ (h1 @ W2 + b2).  All of h1 is needed before this G-multiply,
    # so G is streamed once per layer rather than kept resident across layers.
    out = _hgnn_conv(gp, h1, w2p, b2p, None,
                     out_dtype=jnp.float32, tm=tile, tk=tile, vmem_limit_bytes=vmem_limit)
    return out[:n, :n_class]


def make_dropout_mask(key, shape, p):
    """F.dropout-style training mask: keep with prob 1-p, kept values scaled by 1/(1-p)."""
    # TODO(synk): RNG stream differs from torch's; statistics match but the exact mask does not.
    if p <= 0.0:
        return jnp.ones(shape, jnp.float32)
    if p >= 1.0:
        return jnp.zeros(shape, jnp.float32)
    keep = jax.random.bernoulli(key, 1.0 - p, shape)
    return keep.astype(jnp.float32) * (1.0 / (1.0 - p))


def init_hgnn_params(key, in_ch, n_hid, n_class):
    """Matches HGNN_conv.reset_parameters: U(-stdv, stdv) with stdv = 1/sqrt(out_ft)."""
    k1, k2, k3, k4 = jax.random.split(key, 4)
    stdv1 = 1.0 / math.sqrt(n_hid)
    stdv2 = 1.0 / math.sqrt(n_class)
    w1 = jax.random.uniform(k1, (in_ch, n_hid), jnp.float32, -stdv1, stdv1)
    b1 = jax.random.uniform(k2, (1, n_hid), jnp.float32, -stdv1, stdv1)
    w2 = jax.random.uniform(k3, (n_hid, n_class), jnp.float32, -stdv2, stdv2)
    b2 = jax.random.uniform(k4, (1, n_class), jnp.float32, -stdv2, stdv2)
    return w1, b1, w2, b2


if __name__ == "__main__":
    # Small shapes consistent with the module: N nodes, in_ch features, n_hid hidden, n_class out.
    N, in_ch, n_hid, n_class = 300, 16, 32, 8
    dropout_p = 0.5

    key = jax.random.PRNGKey(0)
    kx, kg, kp, kd = jax.random.split(key, 4)

    x = jax.random.normal(kx, (N, in_ch), jnp.float32)
    g_raw = jax.random.uniform(kg, (N, N), jnp.float32)
    G = (g_raw + g_raw.T) / (2.0 * N)  # symmetric, roughly row-normalized Laplacian-like matrix

    w1, b1, w2, b2 = init_hgnn_params(kp, in_ch, n_hid, n_class)
    mask = make_dropout_mask(kd, (N, n_hid), dropout_p)

    fwd = jax.jit(hgnn_forward)
    out = jax.block_until_ready(fwd(x, G, w1, b1, w2, b2, mask))

    # Pure-JAX f32 reference with the same dropout mask (kernel uses bf16 MXU operands,
    # so allow a small relative tolerance).
    h1_ref = jnp.maximum(G @ (x @ w1 + b1), 0.0) * mask
    ref = G @ (h1_ref @ w2 + b2)

    assert out.shape == (N, n_class)
    assert bool(jnp.all(jnp.isfinite(out)))
    rel_err = float(jnp.linalg.norm(out - ref) / (jnp.linalg.norm(ref) + 1e-12))
    assert rel_err < 2e-2, f"relative error too large: {rel_err}"
    print("KERNEL_OK")
</pallas_src>

<mosaic_0001>
module attributes {stable_mosaic.version = 11 : i64} {
  func.func @_conv_relu_dropout_kernel(%arg0: i32, %arg1: i32, %arg2: memref<128x128xbf16, #tpu.memory_space<vmem>>, %arg3: memref<128x128xbf16, #tpu.memory_space<vmem>>, %arg4: memref<128x128xbf16, #tpu.memory_space<vmem>>, %arg5: memref<1x128xf32, #tpu.memory_space<vmem>>, %arg6: memref<128x128xf32, #tpu.memory_space<vmem>>, %arg7: memref<128x128xbf16, #tpu.memory_space<vmem>>, %arg8: memref<128x128xf32, #tpu.memory_space<vmem>>) attributes {dimension_semantics = [#tpu.dimension_semantics<parallel>, #tpu.dimension_semantics<arbitrary>], iteration_bounds = array<i64: 3, 3>, scalar_prefetch = 0 : i64, scratch_operands = 1 : i64, tpu.core_type = #tpu.core_type<tc>, window_params = [{transform_indices = @transform_0, window_bounds = array<i64: 128, 128>}, {transform_indices = @transform_1, window_bounds = array<i64: 128, 128>}, {pipeline_mode = #tpu.pipeline_mode<synchronous>, transform_indices = @transform_2, window_bounds = array<i64: 128, 128>}, {pipeline_mode = #tpu.pipeline_mode<synchronous>, transform_indices = @transform_3, window_bounds = array<i64: 1, 128>}, {transform_indices = @transform_4, window_bounds = array<i64: 128, 128>}, {transform_indices = @transform_5, window_bounds = array<i64: 128, 128>}]} {
    %c0_i32 = arith.constant 0 : i32
    %0 = arith.cmpi eq, %arg1, %c0_i32 : i32
    %1 = arith.extui %0 : i1 to i32
    %c0_i32_0 = arith.constant 0 : i32
    %2 = arith.cmpi ne, %1, %c0_i32_0 : i32
    scf.if %2 {
      %cst_14 = arith.constant 0.000000e+00 : f32
      %18 = vector.broadcast %cst_14 : f32 to vector<128x128xf32>
      %c0_15 = arith.constant 0 : index
      %c0_16 = arith.constant 0 : index
      %19 = vector.load %arg8[%c0_15, %c0_16] : memref<128x128xf32, #tpu.memory_space<vmem>>, vector<128x128xf32>
      tpu.vector_store %arg8[%c0_15, %c0_16], %18 {strides = array<i32>} : memref<128x128xf32, #tpu.memory_space<vmem>>, vector<128x128xf32>,
    } else {
    }
    %c0 = arith.constant 0 : index
    %c0_1 = arith.constant 0 : index
    %3 = vector.load %arg3[%c0, %c0_1] : memref<128x128xbf16, #tpu.memory_space<vmem>>, vector<128x128xbf16>
    %c0_2 = arith.constant 0 : index
    %c0_3 = arith.constant 0 : index
    %4 = vector.load %arg4[%c0_2, %c0_3] : memref<128x128xbf16, #tpu.memory_space<vmem>>, vector<128x128xbf16>
    %cst = arith.constant dense<0.000000e+00> : vector<128x128xf32>
    %5 = tpu.matmul %3, %4, %cst {dimension_numbers = #tpu.dot_dimension_numbers<[1], [0], [0], [1], [0, 0, 1, 1], [], []>} : vector<128x128xbf16>, vector<128x128xbf16>, vector<128x128xf32> -> vector<128x128xf32>
    %c0_4 = arith.constant 0 : index
    %c0_5 = arith.constant 0 : index
    %6 = vector.load %arg5[%c0_4, %c0_5] : memref<1x128xf32, #tpu.memory_space<vmem>>, vector<1x128xf32>
    %7 = vector.broadcast %6 : vector<1x128xf32> to vector<128x128xf32>
    %8 = arith.addf %5, %7 : vector<128x128xf32>
    %c0_6 = arith.constant 0 : index
    %c0_7 = arith.constant 0 : index
    %9 = vector.load %arg8[%c0_6, %c0_7] : memref<128x128xf32, #tpu.memory_space<vmem>>, vector<128x128xf32>
    %c0_8 = arith.constant 0 : index
    %c0_9 = arith.constant 0 : index
    %10 = vector.load %arg2[%c0_8, %c0_9] : memref<128x128xbf16, #tpu.memory_space<vmem>>, vector<128x128xbf16>
    %11 = arith.truncf %8 : vector<128x128xf32> to vector<128x128xbf16>
    %cst_10 = arith.constant dense<0.000000e+00> : vector<128x128xf32>
    %12 = tpu.matmul %10, %11, %cst_10 {dimension_numbers = #tpu.dot_dimension_numbers<[1], [0], [0], [1], [0, 0, 1, 1], [], []>} : vector<128x128xbf16>, vector<128x128xbf16>, vector<128x128xf32> -> vector<128x128xf32>
    %13 = arith.addf %9, %12 : vector<128x128xf32>
    %c0_11 = arith.constant 0 : index
    %c0_12 = arith.constant 0 : index
    %14 = vector.load %arg8[%c0_11, %c0_12] : memref<128x128xf32, #tpu.memory_space<vmem>>, vector<128x128xf32>
    tpu.vector_store %arg8[%c0_11, %c0_12], %13 {strides = array<i32>} : memref<128x128xf32, #tpu.memory_space<vmem>>, vector<128x128xf32>,
    %c2_i32 = arith.constant 2 : i32
    %15 = arith.cmpi eq, %arg1, %c2_i32 : i32
    %16 = arith.extui %15 : i1 to i32
    %c0_i32_13 = arith.constant 0 : i32
    %17 = arith.cmpi ne, %16, %c0_i32_13 : i32
    scf.if %17 {
      %c0_14 = arith.constant 0 : index
      %c0_15 = arith.constant 0 : index
      %18 = vector.load %arg8[%c0_14, %c0_15] : memref<128x128xf32, #tpu.memory_space<vmem>>, vector<128x128xf32>
      %cst_16 = arith.constant 0.000000e+00 : f32
      %19 = vector.broadcast %cst_16 : f32 to vector<128x128xf32>
      %20 = arith.maximumf %18, %19 : vector<128x128xf32>
      %c0_17 = arith.constant 0 : index
      %c0_18 = arith.constant 0 : index
      %21 = vector.load %arg6[%c0_17, %c0_18] : memref<128x128xf32, #tpu.memory_space<vmem>>, vector<128x128xf32>
      %22 = arith.mulf %20, %21 : vector<128x128xf32>
      %23 = arith.truncf %22 : vector<128x128xf32> to vector<128x128xbf16>
      %c0_19 = arith.constant 0 : index
      %c0_20 = arith.constant 0 : index
      %24 = vector.load %arg7[%c0_19, %c0_20] : memref<128x128xbf16, #tpu.memory_space<vmem>>, vector<128x128xbf16>
      tpu.vector_store %arg7[%c0_19, %c0_20], %23 {strides = array<i32>} : memref<128x128xbf16, #tpu.memory_space<vmem>>, vector<128x128xbf16>,
    } else {
    }
    return
  }
  func.func @transform_0(%arg0: i32, %arg1: i32) -> (i32, i32) {
    %c0_i32 = arith.constant 0 : i32
    return %arg0, %arg1 : i32, i32
  }
  func.func @transform_1(%arg0: i32, %arg1: i32) -> (i32, i32) {
    %c0_i32 = arith.constant 0 : i32
    %c0_i32_0 = arith.constant 0 : i32
    return %arg1, %c0_i32 : i32, i32
  }
  func.func @transform_2(%arg0: i32, %arg1: i32) -> (i32, i32) {
    %c0_i32 = arith.constant 0 : i32
    %c0_i32_0 = arith.constant 0 : i32
    %c0_i32_1 = arith.constant 0 : i32
    return %c0_i32, %c0_i32_0 : i32, i32
  }
  func.func @transform_3(%arg0: i32, %arg1: i32) -> (i32, i32) {
    %c0_i32 = arith.constant 0 : i32
    %c0_i32_0 = arith.constant 0 : i32
    %c0_i32_1 = arith.constant 0 : i32
    return %c0_i32, %c0_i32_0 : i32, i32
  }
  func.func @transform_4(%arg0: i32, %arg1: i32) -> (i32, i32) {
    %c0_i32 = arith.constant 0 : i32
    %c0_i32_0 = arith.constant 0 : i32
    return %arg0, %c0_i32 : i32, i32
  }
  func.func @transform_5(%arg0: i32, %arg1: i32) -> (i32, i32) {
    %c0_i32 = arith.constant 0 : i32
    %c0_i32_0 = arith.constant 0 : i32
    return %arg0, %c0_i32 : i32, i32
  }
}

module attributes {stable_mosaic.version = 11 : i64} {
  func.func @_conv_kernel(%arg0: i32, %arg1: i32, %arg2: memref<128x128xbf16, #tpu.memory_space<vmem>>, %arg3: memref<128x128xbf16, #tpu.memory_space<vmem>>, %arg4: memref<128x128xbf16, #tpu.memory_space<vmem>>, %arg5: memref<1x128xf32, #tpu.memory_space<vmem>>, %arg6: memref<128x128xf32, #tpu.memory_space<vmem>>, %arg7: memref<128x128xf32, #tpu.memory_space<vmem>>) attributes {dimension_semantics = [#tpu.dimension_semantics<parallel>, #tpu.dimension_semantics<arbitrary>], iteration_bounds = array<i64: 3, 3>, scalar_prefetch = 0 : i64, scratch_operands = 1 : i64, tpu.core_type = #tpu.core_type<tc>, window_params = [{transform_indices = @transform_0, window_bounds = array<i64: 128, 128>}, {transform_indices = @transform_1, window_bounds = array<i64: 128, 128>}, {pipeline_mode = #tpu.pipeline_mode<synchronous>, transform_indices = @transform_2, window_bounds = array<i64: 128, 128>}, {pipeline_mode = #tpu.pipeline_mode<synchronous>, transform_indices = @transform_3, window_bounds = array<i64: 1, 128>}, {transform_indices = @transform_4, window_bounds = array<i64: 128, 128>}]} {
    %c0_i32 = arith.constant 0 : i32
    %0 = arith.cmpi eq, %arg1, %c0_i32 : i32
    %1 = arith.extui %0 : i1 to i32
    %c0_i32_0 = arith.constant 0 : i32
    %2 = arith.cmpi ne, %1, %c0_i32_0 : i32
    scf.if %2 {
      %cst_14 = arith.constant 0.000000e+00 : f32
      %18 = vector.broadcast %cst_14 : f32 to vector<128x128xf32>
      %c0_15 = arith.constant 0 : index
      %c0_16 = arith.constant 0 : index
      %19 = vector.load %arg7[%c0_15, %c0_16] : memref<128x128xf32, #tpu.memory_space<vmem>>, vector<128x128xf32>
      tpu.vector_store %arg7[%c0_15, %c0_16], %18 {strides = array<i32>} : memref<128x128xf32, #tpu.memory_space<vmem>>, vector<128x128xf32>,
    } else {
    }
    %c0 = arith.constant 0 : index
    %c0_1 = arith.constant 0 : index
    %3 = vector.load %arg3[%c0, %c0_1] : memref<128x128xbf16, #tpu.memory_space<vmem>>, vector<128x128xbf16>
    %c0_2 = arith.constant 0 : index
    %c0_3 = arith.constant 0 : index
    %4 = vector.load %arg4[%c0_2, %c0_3] : memref<128x128xbf16, #tpu.memory_space<vmem>>, vector<128x128xbf16>
    %cst = arith.constant dense<0.000000e+00> : vector<128x128xf32>
    %5 = tpu.matmul %3, %4, %cst {dimension_numbers = #tpu.dot_dimension_numbers<[1], [0], [0], [1], [0, 0, 1, 1], [], []>} : vector<128x128xbf16>, vector<128x128xbf16>, vector<128x128xf32> -> vector<128x128xf32>
    %c0_4 = arith.constant 0 : index
    %c0_5 = arith.constant 0 : index
    %6 = vector.load %arg5[%c0_4, %c0_5] : memref<1x128xf32, #tpu.memory_space<vmem>>, vector<1x128xf32>
    %7 = vector.broadcast %6 : vector<1x128xf32> to vector<128x128xf32>
    %8 = arith.addf %5, %7 : vector<128x128xf32>
    %c0_6 = arith.constant 0 : index
    %c0_7 = arith.constant 0 : index
    %9 = vector.load %arg7[%c0_6, %c0_7] : memref<128x128xf32, #tpu.memory_space<vmem>>, vector<128x128xf32>
    %c0_8 = arith.constant 0 : index
    %c0_9 = arith.constant 0 : index
    %10 = vector.load %arg2[%c0_8, %c0_9] : memref<128x128xbf16, #tpu.memory_space<vmem>>, vector<128x128xbf16>
    %11 = arith.truncf %8 : vector<128x128xf32> to vector<128x128xbf16>
    %cst_10 = arith.constant dense<0.000000e+00> : vector<128x128xf32>
    %12 = tpu.matmul %10, %11, %cst_10 {dimension_numbers = #tpu.dot_dimension_numbers<[1], [0], [0], [1], [0, 0, 1, 1], [], []>} : vector<128x128xbf16>, vector<128x128xbf16>, vector<128x128xf32> -> vector<128x128xf32>
    %13 = arith.addf %9, %12 : vector<128x128xf32>
    %c0_11 = arith.constant 0 : index
    %c0_12 = arith.constant 0 : index
    %14 = vector.load %arg7[%c0_11, %c0_12] : memref<128x128xf32, #tpu.memory_space<vmem>>, vector<128x128xf32>
    tpu.vector_store %arg7[%c0_11, %c0_12], %13 {strides = array<i32>} : memref<128x128xf32, #tpu.memory_space<vmem>>, vector<128x128xf32>,
    %c2_i32 = arith.constant 2 : i32
    %15 = arith.cmpi eq, %arg1, %c2_i32 : i32
    %16 = arith.extui %15 : i1 to i32
    %c0_i32_13 = arith.constant 0 : i32
    %17 = arith.cmpi ne, %16, %c0_i32_13 : i32
    scf.if %17 {
      %c0_14 = arith.constant 0 : index
      %c0_15 = arith.constant 0 : index
      %18 = vector.load %arg7[%c0_14, %c0_15] : memref<128x128xf32, #tpu.memory_space<vmem>>, vector<128x128xf32>
      %c0_16 = arith.constant 0 : index
      %c0_17 = arith.constant 0 : index
      %19 = vector.load %arg6[%c0_16, %c0_17] : memref<128x128xf32, #tpu.memory_space<vmem>>, vector<128x128xf32>
      tpu.vector_store %arg6[%c0_16, %c0_17], %18 {strides = array<i32>} : memref<128x128xf32, #tpu.memory_space<vmem>>, vector<128x128xf32>,
    } else {
    }
    return
  }
  func.func @transform_0(%arg0: i32, %arg1: i32) -> (i32, i32) {
    %c0_i32 = arith.constant 0 : i32
    return %arg0, %arg1 : i32, i32
  }
  func.func @transform_1(%arg0: i32, %arg1: i32) -> (i32, i32) {
    %c0_i32 = arith.constant 0 : i32
    %c0_i32_0 = arith.constant 0 : i32
    return %arg1, %c0_i32 : i32, i32
  }
  func.func @transform_2(%arg0: i32, %arg1: i32) -> (i32, i32) {
    %c0_i32 = arith.constant 0 : i32
    %c0_i32_0 = arith.constant 0 : i32
    %c0_i32_1 = arith.constant 0 : i32
    return %c0_i32, %c0_i32_0 : i32, i32
  }
  func.func @transform_3(%arg0: i32, %arg1: i32) -> (i32, i32) {
    %c0_i32 = arith.constant 0 : i32
    %c0_i32_0 = arith.constant 0 : i32
    %c0_i32_1 = arith.constant 0 : i32
    return %c0_i32, %c0_i32_0 : i32, i32
  }
  func.func @transform_4(%arg0: i32, %arg1: i32) -> (i32, i32) {
    %c0_i32 = arith.constant 0 : i32
    %c0_i32_0 = arith.constant 0 : i32
    return %arg0, %c0_i32 : i32, i32
  }
}

</mosaic_0001>

<llo_original>
// kernel: hgnn_forward.2
$region0: #{hgnn_forward.2}
  #allocation0 [shape = 'u32[]', space=smem, size = 0x4, offset = 0x4, fixed_abs, tag = 'smem constant byte address 0x4 - core index']
  #allocation1 [shape = 'u32[72,128]{1,0:T(1,128)}', space=vmem, size = 0x9000, scoped, tag = 'internal scratch']
  #allocation2 [shape = 'f32[128,128]{1,0:T(8,128)}', space=vmem, size = 0x10000, scoped, tag = 'scratch operand']
  %s0 = inlined_call_operand.vmem [shape: bf16[384,384], index: 0, kind: input, shape index: {}]
  %s1 = inlined_call_operand.vmem [shape: bf16[384,128], index: 1, kind: input, shape index: {}]
  %s2 = inlined_call_operand.vmem [shape: bf16[128,128], index: 2, kind: input, shape index: {}]
  %s3 = inlined_call_operand.vmem [shape: f32[1,128], index: 3, kind: input, shape index: {}]
  %s4 = inlined_call_operand.vmem [shape: f32[384,128], index: 4, kind: input, shape index: {}]
  %s5 = inlined_call_operand.vmem [shape: bf16[384,128], index: 5, kind: output, shape index: {}]
  %s6 = sld [smem:[#allocation0]]
  $region102: #{hgnn_forward.2} parent=0
    _
  %s8 = ssub.s32 1, %s6
  %s9 = scalar_select 0, %s8, %s6
  $region1: #{hgnn_forward.2} parent=0
    #allocation3 [shape = 'u8[65536]{0}', space=vmem, size = 0x10000, scoped, tag = 'input window, operand 0']
    loop: start=0, step=1, limit=11
    $region2: #{hgnn_forward.2} parent=1 // loop_pre_header
      _
    $region3: #{hgnn_forward.2} parent=1 // loop_header
      %s11 = sphi 0, %s15
      %p12 = scmp.ge.s32.totalorder %s11, 11
      %s18 = sphi 0, %s30
      %s19 = sphi 0, %s26
      %s20 = sphi 0, %s18
      %s21 = sphi 0, %s19
      %s22 = sphi 0, %s20
      %s23 = sphi 0, %s21
      %s35 = sphi 0, %s37
      %s38 = sphi 0, %s35
      %s39 = sphi 0, %s38
      %s55 = sphi 0, %s39
      %s61 = sphi 0, %s63
      %s64 = sphi 0, %s61
      %s65 = sphi 0, %s64
      %s81 = sphi 0, %s65
      %s85 = sphi 0, %s85
      %s87 = sphi 0, %s85
      %s88 = sphi 0, %s87
      %s102 = sphi 0, %s88
      %s106 = sphi 0, %s106
      %s108 = sphi 0, %s106
      %s109 = sphi 0, %s108
      %s123 = sphi 0, %s109
      %s129 = sphi 0, %s131
      %s132 = sphi 0, %s129
      %s133 = sphi 0, %s132
      %s149 = sphi 0, %s133
      %s155 = sphi 0, %s157
      %s158 = sphi 0, %s155
      %s159 = sphi 0, %s158
      %s175 = sphi 0, %s159
    $region4: #{hgnn_forward.2} parent=1 // loop_header_branch
      %14 = sbr.rel (%p12) target = $region8
    $region5: #{hgnn_forward.2} parent=1 // loop_body
      %s16 = ssub.s32 %s11, 1
      %s17 = ssub.s32 %s11, 2
      %s24 = sadd.s32 1, %s19
      %p25 = scmp.ge.s32.totalorder %s24, 3
      %s26 = scalar_select %p25, 0, %s24
      %s27 = sadd.s32 1, %s18
      %s28 = scalar_select %p25, %s27, %s18
      %p29 = scmp.ge.s32.totalorder %s28, 3
      %s30 = scalar_select %p29, 0, %s28
      %s31 = ssub.s32 %s18, %s30
      %s32 = ssub.s32 %s19, %s26
      %s33 = sor.u32 %s31, %s32
      %p34 = scmp.eq.s32.totalorder %s33, 0
      %s36 = sadd.s32 %s35, 1
      %s37 = scalar_select %p34, %s35, %s36
      %p40 = pneg %p34
      %p41 = scmp.eq.s32.totalorder %s11, 8
      %p42 = por %p40, %p41
      %p43 = scmp.ne.s32.totalorder %s35, %s38
      %p44 = scmp.eq.s32.totalorder %s11, 0
      %p45 = por %p43, %p44
      %p46 = scmp.ne.s32.totalorder %s35, %s38
      %p47 = scmp.eq.s32.totalorder %s16, 8
      %p48 = por %p46, %p47
      %p49 = scmp.ne.s32.totalorder %s38, %s39
      %p50 = scmp.eq.s32.totalorder %s16, 0
      %p51 = por %p49, %p50
      %p52 = scmp.ne.s32.totalorder %s38, %s39
      %p53 = scmp.eq.s32.totalorder %s17, 8
      %p54 = por %p52, %p53
      %p56 = scmp.ne.s32.totalorder %s39, %s55
      %p57 = scmp.eq.s32.totalorder %s17, 0
      %p58 = por %p56, %p57
      %s59 = ssub.s32 %s19, %s26
      %p60 = scmp.eq.s32.totalorder %s59, 0
      %s62 = sadd.s32 %s61, 1
      %s63 = scalar_select %p60, %s61, %s62
      %p66 = pneg %p60
      %p67 = scmp.eq.s32.totalorder %s11, 8
      %p68 = por %p66, %p67
      %p69 = scmp.ne.s32.totalorder %s61, %s64
      %p70 = scmp.eq.s32.totalorder %s11, 0
      %p71 = por %p69, %p70
      %p72 = scmp.ne.s32.totalorder %s61, %s64
      %p73 = scmp.eq.s32.totalorder %s16, 8
      %p74 = por %p72, %p73
      %p75 = scmp.ne.s32.totalorder %s64, %s65
      %p76 = scmp.eq.s32.totalorder %s16, 0
      %p77 = por %p75, %p76
      %p78 = scmp.ne.s32.totalorder %s64, %s65
      %p79 = scmp.eq.s32.totalorder %s17, 8
      %p80 = por %p78, %p79
      %p82 = scmp.ne.s32.totalorder %s65, %s81
      %p83 = scmp.eq.s32.totalorder %s17, 0
      %p84 = por %p82, %p83
      %s86 = sadd.s32 %s85, 1
      %p89 = scmp.eq.s32.totalorder %s11, 8
      %p90 = scmp.ne.s32.totalorder %s85, %s87
      %p91 = scmp.eq.s32.totalorder %s11, 0
      %p92 = por %p90, %p91
      %p93 = scmp.ne.s32.totalorder %s85, %s87
      %p94 = scmp.eq.s32.totalorder %s16, 8
      %p95 = por %p93, %p94
      %p96 = scmp.ne.s32.totalorder %s87, %s88
      %p97 = scmp.eq.s32.totalorder %s16, 0
      %p98 = por %p96, %p97
      %p99 = scmp.ne.s32.totalorder %s87, %s88
      %p100 = scmp.eq.s32.totalorder %s17, 8
      %p101 = por %p99, %p100
      %p103 = scmp.ne.s32.totalorder %s88, %s102
      %p104 = scmp.eq.s32.totalorder %s17, 0
      %p105 = por %p103, %p104
      %s107 = sadd.s32 %s106, 1
      %p110 = scmp.eq.s32.totalorder %s11, 8
      %p111 = scmp.ne.s32.totalorder %s106, %s108
      %p112 = scmp.eq.s32.totalorder %s11, 0
      %p113 = por %p111, %p112
      %p114 = scmp.ne.s32.totalorder %s106, %s108
      %p115 = scmp.eq.s32.totalorder %s16, 8
      %p116 = por %p114, %p115
      %p117 = scmp.ne.s32.totalorder %s108, %s109
      %p118 = scmp.eq.s32.totalorder %s16, 0
      %p119 = por %p117, %p118
      %p120 = scmp.ne.s32.totalorder %s108, %s109
      %p121 = scmp.eq.s32.totalorder %s17, 8
      %p122 = por %p120, %p121
      %p124 = scmp.ne.s32.totalorder %s109, %s123
      %p125 = scmp.eq.s32.totalorder %s17, 0
      %p126 = por %p124, %p125
      %s127 = ssub.s32 %s18, %s30
      %p128 = scmp.eq.s32.totalorder %s127, 0
      %s130 = sadd.s32 %s129, 1
      %s131 = scalar_select %p128, %s129, %s130
      %p134 = pneg %p128
      %p135 = scmp.eq.s32.totalorder %s11, 8
      %p136 = por %p134, %p135
      %p137 = scmp.ne.s32.totalorder %s129, %s132
      %p138 = scmp.eq.s32.totalorder %s11, 0
      %p139 = por %p137, %p138
      %p140 = scmp.ne.s32.totalorder %s129, %s132
      %p141 = scmp.eq.s32.totalorder %s16, 8
      %p142 = por %p140, %p141
      %p143 = scmp.ne.s32.totalorder %s132, %s133
      %p144 = scmp.eq.s32.totalorder %s16, 0
      %p145 = por %p143, %p144
      %p146 = scmp.ne.s32.totalorder %s132, %s133
      %p147 = scmp.eq.s32.totalorder %s17, 8
      %p148 = por %p146, %p147
      %p150 = scmp.ne.s32.totalorder %s133, %s149
      %p151 = scmp.eq.s32.totalorder %s17, 0
      %p152 = por %p150, %p151
      %s153 = ssub.s32 %s18, %s30
      %p154 = scmp.eq.s32.totalorder %s153, 0
      %s156 = sadd.s32 %s155, 1
      %s157 = scalar_select %p154, %s155, %s156
      %p160 = pneg %p154
      %p161 = scmp.eq.s32.totalorder %s11, 8
      %p162 = por %p160, %p161
      %p163 = scmp.ne.s32.totalorder %s155, %s158
      %p164 = scmp.eq.s32.totalorder %s11, 0
      %p165 = por %p163, %p164
      %p166 = scmp.ne.s32.totalorder %s155, %s158
      %p167 = scmp.eq.s32.totalorder %s16, 8
      %p168 = por %p166, %p167
      %p169 = scmp.ne.s32.totalorder %s158, %s159
      %p170 = scmp.eq.s32.totalorder %s16, 0
      %p171 = por %p169, %p170
      %p172 = scmp.ne.s32.totalorder %s158, %s159
      %p173 = scmp.eq.s32.totalorder %s17, 8
      %p174 = por %p172, %p173
      %p176 = scmp.ne.s32.totalorder %s159, %s175
      %p177 = scmp.eq.s32.totalorder %s17, 0
      %p178 = por %p176, %p177
      %p179 = scmp.le.s32.totalorder 1, %s11
      %p180 = scmp.lt.s32.totalorder %s11, 10
      %p181 = pnand %p179, %p180
      %p182 = pneg %p181
      // Predicated region
      $region9: #{hgnn_forward.2} parent=5 // pred_check
        _
      $region10: #{hgnn_forward.2} parent=5 // pred_check_branch
        %184 = sbr.rel (%p181) target = $region12
      $region11: #{hgnn_forward.2} parent=5 // pred_region
        %s185 = ssub.s32 %s11, 1
        // Predicated region
        $region13: #{hgnn_forward.2} parent=11 // pred_check
          %p186 = pneg %p98
        $region14: #{hgnn_forward.2} parent=11 // pred_check_branch
          %188 = sbr.rel (%p186) target = $region16
        $region15: #{hgnn_forward.2} parent=11 // pred_region
          _
        $region16: #{hgnn_forward.2} parent=11 // pred_fallthru
          _
        // Predicated region
        $region17: #{hgnn_forward.2} parent=11 // pred_check
          %p189 = pneg %p119
        $region18: #{hgnn_forward.2} parent=11 // pred_check_branch
          %191 = sbr.rel (%p189) target = $region20
        $region19: #{hgnn_forward.2} parent=11 // pred_region
          _
        $region20: #{hgnn_forward.2} parent=11 // pred_fallthru
          _
      $region12: #{hgnn_forward.2} parent=5 // pred_fallthru
        _
      %p192 = scmp.lt.s32.totalorder %s11, 9
      // Predicated region
      $region21: #{hgnn_forward.2} parent=5 // pred_check
        %p193 = pneg %p192
      $region22: #{hgnn_forward.2} parent=5 // pred_check_branch
        %195 = sbr.rel (%p193) target = $region24
      $region23: #{hgnn_forward.2} parent=5 // pred_region
        // Predicated region
        $region25: #{hgnn_forward.2} parent=23 // pred_check
          %p196 = pneg %p45
        $region26: #{hgnn_forward.2} parent=23 // pred_check_branch
          %198 = sbr.rel (%p196) target = $region28
        $region27: #{hgnn_forward.2} parent=23 // pred_region
          %s199 = sand.u32 %s35, 1
          %s200 = sand.u32 %s35, 1
          %s201 = smul.addr %s200, 64
          %s202 = scalar_lea.vmem [#allocation3], %s201
          %s203 = smul.u32 16, %s18
          %s204 = smul.addr %s203, 3
          %s205 = sadd.s32 %s19, %s204
          %s206 = smul.addr %s205, 4
          %s207 = scalar_lea.vmem %s0, %s206
          // Predicated region
          $region29: #{hgnn_forward.2} parent=27 // pred_check
            _
          $region30: #{hgnn_forward.2} parent=27 // pred_check_branch
            %209 = sbr.rel (0) target = $region32
          $region31: #{hgnn_forward.2} parent=27 // pred_region
            // Predicated region
            $region33: #{hgnn_forward.2} parent=31 // pred_check
              _
            $region34: #{hgnn_forward.2} parent=31 // pred_check_branch
              %211 = sbr.rel target = $region36
            $region35: #{hgnn_forward.2} parent=31 // pred_region
              // Predicated region
              $region48: #{hgnn_forward.2} parent=35 // pred_check
                _
              $region49: #{hgnn_forward.2} parent=35 // pred_check_branch
                %257 = sbr.rel (0) target = $region51
              $region50: #{hgnn_forward.2} parent=35 // pred_region
                loop: start=0, step=1, limit=1
                $region52: #{hgnn_forward.2} parent=50 // loop_pre_header
                  _
                $region53: #{hgnn_forward.2} parent=50 // loop_header
                  %s259 = sphi 0, %s263
                  %p260 = scmp.ge.s32.totalorder %s259, 1
                  %s264 = sphi %s207, %s207
                  %s265 = sphi %s202, %s202
                $region54: #{hgnn_forward.2} parent=50 // loop_header_branch
                  %262 = sbr.rel (%p260) target = $region58
                $region55: #{hgnn_forward.2} parent=50 // loop_body
                  _
                $region56: #{hgnn_forward.2} parent=50 // loop_footer
                  %s263 = sadd.s32 1, %s259
                $region57: #{hgnn_forward.2} parent=50 // loop_footer_branch
                  %258 = sbr.rel target = $region53
                $region58: #{hgnn_forward.2} parent=50 // loop_exit
                  _
                %s267 = ssub.s32 16, 1
                loop: start=0, step=1, limit=1
                $region59: #{hgnn_forward.2} parent=50 // loop_pre_header
                  _
                $region60: #{hgnn_forward.2} parent=50 // loop_header
                  %s269 = sphi 0, %s273
                  %p270 = scmp.ge.s32.totalorder %s269, 1
                  %s274 = sphi %s207, %s207
                  %s275 = sphi %s202, %s202
                $region61: #{hgnn_forward.2} parent=50 // loop_header_branch
                  %272 = sbr.rel (%p270) target = $region65
                $region62: #{hgnn_forward.2} parent=50 // loop_body
                  %v276 = vld [vmem:[%s274] sm:%s267]
                  %277 = vst [vmem:[%s275] sm:%s267] %v276
                  %v278 = vld [vmem:[%s274 + $0xc] sm:%s267]
                  %279 = vst [vmem:[%s275 + $0x4] sm:%s267] %v278
                  %v280 = vld [vmem:[%s274 + $0x18] sm:%s267]
                  %281 = vst [vmem:[%s275 + $0x8] sm:%s267] %v280
                  %v282 = vld [vmem:[%s274 + $0x24] sm:%s267]
                  %283 = vst [vmem:[%s275 + $0xc] sm:%s267] %v282
                  %v284 = vld [vmem:[%s274 + $0x30] sm:%s267]
                  %285 = vst [vmem:[%s275 + $0x10] sm:%s267] %v284
                  %v286 = vld [vmem:[%s274 + $0x3c] sm:%s267]
                  %287 = vst [vmem:[%s275 + $0x14] sm:%s267] %v286
                  %v288 = vld [vmem:[%s274 + $0x48] sm:%s267]
                  %289 = vst [vmem:[%s275 + $0x18] sm:%s267] %v288
                  %v290 = vld [vmem:[%s274 + $0x54] sm:%s267]
                  %291 = vst [vmem:[%s275 + $0x1c] sm:%s267] %v290
                  %v292 = vld [vmem:[%s274 + $0x60] sm:%s267]
                  %293 = vst [vmem:[%s275 + $0x20] sm:%s267] %v292
                  %v294 = vld [vmem:[%s274 + $0x6c] sm:%s267]
                  %295 = vst [vmem:[%s275 + $0x24] sm:%s267] %v294
                  %v296 = vld [vmem:[%s274 + $0x78] sm:%s267]
                  %297 = vst [vmem:[%s275 + $0x28] sm:%s267] %v296
                  %v298 = vld [vmem:[%s274 + $0x84] sm:%s267]
                  %299 = vst [vmem:[%s275 + $0x2c] sm:%s267] %v298
                  %v300 = vld [vmem:[%s274 + $0x90] sm:%s267]
                  %301 = vst [vmem:[%s275 + $0x30] sm:%s267] %v300
                  %v302 = vld [vmem:[%s274 + $0x9c] sm:%s267]
                  %303 = vst [vmem:[%s275 + $0x34] sm:%s267] %v302
                  %v304 = vld [vmem:[%s274 + $0xa8] sm:%s267]
                  %305 = vst [vmem:[%s275 + $0x38] sm:%s267] %v304
                  %v306 = vld [vmem:[%s274 + $0xb4] sm:%s267]
                  %307 = vst [vmem:[%s275 + $0x3c] sm:%s267] %v306
                $region63: #{hgnn_forward.2} parent=50 // loop_footer
                  %s273 = sadd.s32 1, %s269
                $region64: #{hgnn_forward.2} parent=50 // loop_footer_branch
                  %268 = sbr.rel target = $region60
                $region65: #{hgnn_forward.2} parent=50 // loop_exit
                  _
              $region51: #{hgnn_forward.2} parent=35 // pred_fallthru
                _
            $region36: #{hgnn_forward.2} parent=31 // pred_fallthru
              _
            // Predicated region
            $region37: #{hgnn_forward.2} parent=31 // pred_check
              _
            $region38: #{hgnn_forward.2} parent=31 // pred_check_branch
              %213 = sbr.rel (0) target = $region40
            $region39: #{hgnn_forward.2} parent=31 // pred_region
              %s215 = ssub.s32 16, 1
              loop: start=0, step=1, limit=1
              $region41: #{hgnn_forward.2} parent=39 // loop_pre_header
                _
              $region42: #{hgnn_forward.2} parent=39 // loop_header
                %s217 = sphi 0, %s221
                %p218 = scmp.ge.s32.totalorder %s217, 1
                %s222 = sphi %s207, %s207
                %s223 = sphi %s202, %s202
              $region43: #{hgnn_forward.2} parent=39 // loop_header_branch
                %220 = sbr.rel (%p218) target = $region47
              $region44: #{hgnn_forward.2} parent=39 // loop_body
                %v224 = vld [vmem:[%s222] sm:%s215]
                %225 = vst [vmem:[%s223] sm:%s215] %v224
                %v226 = vld [vmem:[%s222 + $0xc] sm:%s215]
                %227 = vst [vmem:[%s223 + $0x4] sm:%s215] %v226
                %v228 = vld [vmem:[%s222 + $0x18] sm:%s215]
                %229 = vst [vmem:[%s223 + $0x8] sm:%s215] %v228
                %v230 = vld [vmem:[%s222 + $0x24] sm:%s215]
                %231 = vst [vmem:[%s223 + $0xc] sm:%s215] %v230
                %v232 = vld [vmem:[%s222 + $0x30] sm:%s215]
                %233 = vst [vmem:[%s223 + $0x10] sm:%s215] %v232
                %v234 = vld [vmem:[%s222 + $0x3c] sm:%s215]
                %235 = vst [vmem:[%s223 + $0x14] sm:%s215] %v234
                %v236 = vld [vmem:[%s222 + $0x48] sm:%s215]
                %237 = vst [vmem:[%s223 + $0x18] sm:%s215] %v236
                %v238 = vld [vmem:[%s222 + $0x54] sm:%s215]
                %239 = vst [vmem:[%s223 + $0x1c] sm:%s215] %v238
                %v240 = vld [vmem:[%s222 + $0x60] sm:%s215]
                %241 = vst [vmem:[%s223 + $0x20] sm:%s215] %v240
                %v242 = vld [vmem:[%s222 + $0x6c] sm:%s215]
                %243 = vst [vmem:[%s223 + $0x24] sm:%s215] %v242
                %v244 = vld [vmem:[%s222 + $0x78] sm:%s215]
                %245 = vst [vmem:[%s223 + $0x28] sm:%s215] %v244
                %v246 = vld [vmem:[%s222 + $0x84] sm:%s215]
                %247 = vst [vmem:[%s223 + $0x2c] sm:%s215] %v246
                %v248 = vld [vmem:[%s222 + $0x90] sm:%s215]
                %249 = vst [vmem:[%s223 + $0x30] sm:%s215] %v248
                %v250 = vld [vmem:[%s222 + $0x9c] sm:%s215]
                %251 = vst [vmem:[%s223 + $0x34] sm:%s215] %v250
                %v252 = vld [vmem:[%s222 + $0xa8] sm:%s215]
                %253 = vst [vmem:[%s223 + $0x38] sm:%s215] %v252
                %v254 = vld [vmem:[%s222 + $0xb4] sm:%s215]
                %255 = vst [vmem:[%s223 + $0x3c] sm:%s215] %v254
              $region45: #{hgnn_forward.2} parent=39 // loop_footer
                %s221 = sadd.s32 1, %s217
              $region46: #{hgnn_forward.2} parent=39 // loop_footer_branch
                %216 = sbr.rel target = $region42
              $region47: #{hgnn_forward.2} parent=39 // loop_exit
                _
            $region40: #{hgnn_forward.2} parent=31 // pred_fallthru
              _
          $region32: #{hgnn_forward.2} parent=27 // pred_fallthru
            _
          %308 = vnop
        $region28: #{hgnn_forward.2} parent=23 // pred_fallthru
          _
        // Predicated region
        $region66: #{hgnn_forward.2} parent=23 // pred_check
          %p309 = pneg %p71
        $region67: #{hgnn_forward.2} parent=23 // pred_check_branch
          %311 = sbr.rel (%p309) target = $region69
        $region68: #{hgnn_forward.2} parent=23 // pred_region
          %s312 = smul.u32 16, %s19
          %p313 = scmp.lt.s32.totalorder %s312, 47
          %s314 = scalar_select %p313, %s312, 47
          %s315 = smul.addr %s314, 4
          %s316 = scalar_lea.vmem %s1, %s315
          %s317 = smul.u32 16, %s19
        $region69: #{hgnn_forward.2} parent=23 // pred_fallthru
          _
        // Predicated region
        $region70: #{hgnn_forward.2} parent=23 // pred_check
          %p318 = pneg %p139
        $region71: #{hgnn_forward.2} parent=23 // pred_check_branch
          %320 = sbr.rel (%p318) target = $region73
        $region72: #{hgnn_forward.2} parent=23 // pred_region
          %s321 = smul.u32 16, %s18
          %p322 = scmp.lt.s32.totalorder %s321, 47
          %s323 = scalar_select %p322, %s321, 47
          %s324 = smul.addr %s323, 8
          %s325 = scalar_lea.vmem %s4, %s324
          %s326 = smul.u32 16, %s18
        $region73: #{hgnn_forward.2} parent=23 // pred_fallthru
          _
      $region24: #{hgnn_forward.2} parent=5 // pred_fallthru
        _
      %p327 = scmp.le.s32.totalorder 1, %s11
      %p328 = scmp.lt.s32.totalorder %s11, 10
      %p329 = pnand %p327, %p328
      %p330 = pneg %p329
      // Predicated region
      $region74: #{hgnn_forward.2} parent=5 // pred_check
        _
      $region75: #{hgnn_forward.2} parent=5 // pred_check_branch
        %332 = sbr.rel (%p329) target = $region77
      $region76: #{hgnn_forward.2} parent=5 // pred_region
        %s333 = ssub.s32 %s11, 1
        %s334 = sand.u32 %s38, 1
        %s335 = sand.u32 %s38, 1
        %s336 = smul.addr %s335, 64
        %s337 = scalar_lea.vmem [#allocation3], %s336
        // Predicated region
        $region78: #{hgnn_forward.2} parent=76 // pred_check
          %p338 = pneg %p51
        $region79: #{hgnn_forward.2} parent=76 // pred_check_branch
          %340 = sbr.rel (%p338) target = $region81
        $region80: #{hgnn_forward.2} parent=76 // pred_region
          _
        $region81: #{hgnn_forward.2} parent=76 // pred_fallthru
          _
        %s341 = sand.u32 %s38, 1
        %s342 = sand.u32 %s38, 1
        %s343 = smul.addr %s342, 64
        %s344 = scalar_lea.vmem [#allocation3], %s343
        %p345 = pneg %p51
        %p346 = pneg %p48
        %s347 = smul.u32 16, %s21
        %p348 = scmp.lt.s32.totalorder %s347, 47
        %s349 = scalar_select %p348, %s347, 47
        %s350 = smul.addr %s349, 4
        %s351 = scalar_lea.vmem %s1, %s350
        %p352 = pneg %p77
        %p353 = pneg %p74
        %p354 = pneg %p98
        %p355 = pneg %p95
        %p356 = pneg %p119
        %p357 = pneg %p116
        %s358 = smul.u32 16, %s20
        %p359 = scmp.lt.s32.totalorder %s358, 47
        %s360 = scalar_select %p359, %s358, 47
        %s361 = smul.addr %s360, 8
        %s362 = scalar_lea.vmem %s4, %s361
        %p363 = pneg %p145
        %p364 = pneg %p142
        %p365 = pneg %p171
        %p366 = pneg %p168
        %s367 = smul.u32 16, %s20
        %p368 = scmp.lt.s32.totalorder %s367, 47
        %s369 = scalar_select %p368, %s367, 47
        %s370 = smul.addr %s369, 4
        %s371 = scalar_lea.vmem %s5, %s370
        %s372 = smul.u32 16, %s20
        %s373 = smul.u32 16, %s21
        %p374 = scmp.lt.s32.totalorder %s373, 47
        %s375 = scalar_select %p374, %s373, 47
        %s376 = smul.addr %s375, 4
        %s377 = scalar_lea.vmem %s1, %s376
        %s378 = smul.u32 16, %s21
        %s379 = smul.u32 16, %s20
        %p380 = scmp.lt.s32.totalorder %s379, 47
        %s381 = scalar_select %p380, %s379, 47
        %s382 = smul.addr %s381, 8
        %s383 = scalar_lea.vmem %s4, %s382
        %s384 = smul.u32 16, %s20
        %s385 = smul.u32 16, %s20
        %p386 = scmp.lt.s32.totalorder %s385, 47
        %s387 = scalar_select %p386, %s385, 47
        %s388 = smul.addr %s387, 4
        %s389 = scalar_lea.vmem %s5, %s388
        %s390 = smul.u32 16, %s20
        %p391 = scmp.eq.s32.totalorder %s21, 0
        // Predicated region
        $region82: #{hgnn_forward.2} parent=76 // pred_check
          %p392 = pneg %p391
        $region83: #{hgnn_forward.2} parent=76 // pred_check_branch
          %394 = sbr.rel (%p392) target = $region85
        $region84: #{hgnn_forward.2} parent=76 // pred_region
          %395 = vst [vmem:[#allocation2] sm:$0xff] 0.0
          %396 = vst [vmem:[#allocation2 + $0x8] sm:$0xff] 0.0
          %397 = vst [vmem:[#allocation2 + $0x10] sm:$0xff] 0.0
          %398 = vst [vmem:[#allocation2 + $0x18] sm:$0xff] 0.0
          %399 = vst [vmem:[#allocation2 + $0x20] sm:$0xff] 0.0
          %400 = vst [vmem:[#allocation2 + $0x28] sm:$0xff] 0.0
          %401 = vst [vmem:[#allocation2 + $0x30] sm:$0xff] 0.0
          %402 = vst [vmem:[#allocation2 + $0x38] sm:$0xff] 0.0
          %403 = vst [vmem:[#allocation2 + $0x40] sm:$0xff] 0.0
          %404 = vst [vmem:[#allocation2 + $0x48] sm:$0xff] 0.0
          %405 = vst [vmem:[#allocation2 + $0x50] sm:$0xff] 0.0
          %406 = vst [vmem:[#allocation2 + $0x58] sm:$0xff] 0.0
          %407 = vst [vmem:[#allocation2 + $0x60] sm:$0xff] 0.0
          %408 = vst [vmem:[#allocation2 + $0x68] sm:$0xff] 0.0
          %409 = vst [vmem:[#allocation2 + $0x70] sm:$0xff] 0.0
          %410 = vst [vmem:[#allocation2 + $0x78] sm:$0xff] 0.0
        $region85: #{hgnn_forward.2} parent=76 // pred_fallthru
          _
        %v411 = vld [vmem:[%s377] sm:$0xf]
        %v412 = vld [vmem:[%s377 + $0x4] sm:$0xf]
        %v413 = vld [vmem:[%s377 + $0x8] sm:$0xf]
        %v414 = vld [vmem:[%s377 + $0xc] sm:$0xf]
        %v415 = vld [vmem:[%s377 + $0x10] sm:$0xf]
        %v416 = vld [vmem:[%s377 + $0x14] sm:$0xf]
        %v417 = vld [vmem:[%s377 + $0x18] sm:$0xf]
        %v418 = vld [vmem:[%s377 + $0x1c] sm:$0xf]
        %v419 = vld [vmem:[%s377 + $0x20] sm:$0xf]
        %v420 = vld [vmem:[%s377 + $0x24] sm:$0xf]
        %v421 = vld [vmem:[%s377 + $0x28] sm:$0xf]
        %v422 = vld [vmem:[%s377 + $0x2c] sm:$0xf]
        %v423 = vld [vmem:[%s377 + $0x30] sm:$0xf]
        %v424 = vld [vmem:[%s377 + $0x34] sm:$0xf]
        %v425 = vld [vmem:[%s377 + $0x38] sm:$0xf]
        %v426 = vld [vmem:[%s377 + $0x3c] sm:$0xf]
        %v427 = vld [vmem:[%s2] sm:$0xf]
        %v428 = vld [vmem:[%s2 + $0x4] sm:$0xf]
        %v429 = vld [vmem:[%s2 + $0x8] sm:$0xf]
        %v430 = vld [vmem:[%s2 + $0xc] sm:$0xf]
        %v431 = vld [vmem:[%s2 + $0x10] sm:$0xf]
        %v432 = vld [vmem:[%s2 + $0x14] sm:$0xf]
        %v433 = vld [vmem:[%s2 + $0x18] sm:$0xf]
        %v434 = vld [vmem:[%s2 + $0x1c] sm:$0xf]
        %v435 = vld [vmem:[%s2 + $0x20] sm:$0xf]
        %v436 = vld [vmem:[%s2 + $0x24] sm:$0xf]
        %v437 = vld [vmem:[%s2 + $0x28] sm:$0xf]
        %v438 = vld [vmem:[%s2 + $0x2c] sm:$0xf]
        %v439 = vld [vmem:[%s2 + $0x30] sm:$0xf]
        %v440 = vld [vmem:[%s2 + $0x34] sm:$0xf]
        %v441 = vld [vmem:[%s2 + $0x38] sm:$0xf]
        %v442 = vld [vmem:[%s2 + $0x3c] sm:$0xf]
        %v443 = vld [vmem:[%s3] sm:$0x1]
        %v445 = vperm.slane %v443, 0
        %v463 = vunpack.c.l.b16 %v411
        %v464 = vunpack.c.l.b16 %v412
        %v465 = vunpack.c.l.b16 %v413
        %v466 = vunpack.c.l.b16 %v414
        %v467 = vunpack.c.l.b16 %v415
        %v468 = vunpack.c.l.b16 %v416
        %v469 = vunpack.c.l.b16 %v417
        %v470 = vunpack.c.l.b16 %v418
        %v471 = vunpack.c.l.b16 %v419
        %v472 = vunpack.c.l.b16 %v420
        %v473 = vunpack.c.l.b16 %v421
        %v474 = vunpack.c.l.b16 %v422
        %v475 = vunpack.c.l.b16 %v423
        %v476 = vunpack.c.l.b16 %v424
        %v477 = vunpack.c.l.b16 %v425
        %v478 = vunpack.c.l.b16 %v426
        %v479 = vpack.c.b16 %v464, %v463
        %v480 = vpack.c.b16 %v466, %v465
        %v481 = vpack.c.b16 %v468, %v467
        %v482 = vpack.c.b16 %v470, %v469
        %v483 = vpack.c.b16 %v472, %v471
        %v484 = vpack.c.b16 %v474, %v473
        %v485 = vpack.c.b16 %v476, %v475
        %v486 = vpack.c.b16 %v478, %v477
        %v511 = vunpack.c.l.b16 %v427
        %v512 = vunpack.c.l.b16 %v428
        %v513 = vunpack.c.l.b16 %v429
        %v514 = vunpack.c.l.b16 %v430
        %v515 = vunpack.c.l.b16 %v431
        %v516 = vunpack.c.l.b16 %v432
        %v517 = vunpack.c.l.b16 %v433
        %v518 = vunpack.c.l.b16 %v434
        %v519 = vunpack.c.l.b16 %v435
        %v520 = vunpack.c.l.b16 %v436
        %v521 = vunpack.c.l.b16 %v437
        %v522 = vunpack.c.l.b16 %v438
        %v523 = vunpack.c.l.b16 %v439
        %v524 = vunpack.c.l.b16 %v440
        %v525 = vunpack.c.l.b16 %v441
        %v526 = vunpack.c.l.b16 %v442
        %v527 = vpack.c.b16 %v512, %v511
        %v528 = vpack.c.b16 %v514, %v513
        %v529 = vpack.c.b16 %v516, %v515
        %v530 = vpack.c.b16 %v518, %v517
        %v531 = vpack.c.b16 %v520, %v519
        %v532 = vpack.c.b16 %v522, %v521
        %v533 = vpack.c.b16 %v524, %v523
        %v534 = vpack.c.b16 %v526, %v525
        %543 = vmatpush.bf16.msra.mxu0 %v534
        %544 = vmatpush.bf16.msra.mxu0 %v533
        %545 = vmatpush.bf16.msra.mxu0 %v532
        %546 = vmatpush.bf16.msra.mxu0 %v531
        %547 = vmatpush.bf16.msra.mxu0 %v530
        %548 = vmatpush.bf16.msra.mxu0 %v529
        %549 = vmatpush.bf16.msra.mxu0 %v528
        %550 = vmatpush.bf16.msra.mxu0 %v527
        %551 = vmatmul.bf16.gmra.mxu0 %v479
        %v552 = vpop.f32.mrf.mxu0
        %v553 = vadd.f32 %v445, %v552
        %v554 = vpop.f32.mrf.mxu0
        %v555 = vadd.f32 %v445, %v554
        %556 = vmatmul.bf16.gmra.mxu0 %v480
        %v557 = vpop.f32.mrf.mxu0
        %v558 = vadd.f32 %v445, %v557
        %v559 = vpop.f32.mrf.mxu0
        %v560 = vadd.f32 %v445, %v559
        %561 = vmatmul.bf16.gmra.mxu0 %v481
        %v562 = vpop.f32.mrf.mxu0
        %v563 = vadd.f32 %v445, %v562
        %v564 = vpop.f32.mrf.mxu0
        %v565 = vadd.f32 %v445, %v564
        %566 = vmatmul.bf16.gmra.mxu0 %v482
        %v567 = vpop.f32.mrf.mxu0
        %v568 = vadd.f32 %v445, %v567
        %v569 = vpop.f32.mrf.mxu0
        %v570 = vadd.f32 %v445, %v569
        %571 = vmatmul.bf16.gmra.mxu0 %v483
        %v572 = vpop.f32.mrf.mxu0
        %v573 = vadd.f32 %v445, %v572
        %v574 = vpop.f32.mrf.mxu0
        %v575 = vadd.f32 %v445, %v574
        %576 = vmatmul.bf16.gmra.mxu0 %v484
        %v577 = vpop.f32.mrf.mxu0
        %v578 = vadd.f32 %v445, %v577
        %v579 = vpop.f32.mrf.mxu0
        %v580 = vadd.f32 %v445, %v579
        %581 = vmatmul.bf16.gmra.mxu0 %v485
        %v582 = vpop.f32.mrf.mxu0
        %v583 = vadd.f32 %v445, %v582
        %v584 = vpop.f32.mrf.mxu0
        %v585 = vadd.f32 %v445, %v584
        %586 = vmatmul.bf16.gmra.mxu0 %v486
        %v587 = vpop.f32.mrf.mxu0
        %v588 = vadd.f32 %v445, %v587
        %v589 = vpop.f32.mrf.mxu0
        %v590 = vadd.f32 %v445, %v589
        %591 = vdwg.mxu0
        %v592 = vld [vmem:[#allocation2] sm:$0xff]
        %v593 = vld [vmem:[#allocation2 + $0x8] sm:$0xff]
        %v594 = vld [vmem:[#allocation2 + $0x10] sm:$0xff]
        %v595 = vld [vmem:[#allocation2 + $0x18] sm:$0xff]
        %v596 = vld [vmem:[#allocation2 + $0x20] sm:$0xff]
        %v597 = vld [vmem:[#allocation2 + $0x28] sm:$0xff]
        %v598 = vld [vmem:[#allocation2 + $0x30] sm:$0xff]
        %v599 = vld [vmem:[#allocation2 + $0x38] sm:$0xff]
        %v600 = vld [vmem:[#allocation2 + $0x40] sm:$0xff]
        %v601 = vld [vmem:[#allocation2 + $0x48] sm:$0xff]
        %v602 = vld [vmem:[#allocation2 + $0x50] sm:$0xff]
        %v603 = vld [vmem:[#allocation2 + $0x58] sm:$0xff]
        %v604 = vld [vmem:[#allocation2 + $0x60] sm:$0xff]
        %v605 = vld [vmem:[#allocation2 + $0x68] sm:$0xff]
        %v606 = vld [vmem:[#allocation2 + $0x70] sm:$0xff]
        %v607 = vld [vmem:[#allocation2 + $0x78] sm:$0xff]
        %v608 = vld [vmem:[%s337] sm:$0xf]
        %v609 = vld [vmem:[%s337 + $0x4] sm:$0xf]
        %v610 = vld [vmem:[%s337 + $0x8] sm:$0xf]
        %v611 = vld [vmem:[%s337 + $0xc] sm:$0xf]
        %v612 = vld [vmem:[%s337 + $0x10] sm:$0xf]
        %v613 = vld [vmem:[%s337 + $0x14] sm:$0xf]
        %v614 = vld [vmem:[%s337 + $0x18] sm:$0xf]
        %v615 = vld [vmem:[%s337 + $0x1c] sm:$0xf]
        %v616 = vld [vmem:[%s337 + $0x20] sm:$0xf]
        %v617 = vld [vmem:[%s337 + $0x24] sm:$0xf]
        %v618 = vld [vmem:[%s337 + $0x28] sm:$0xf]
        %v619 = vld [vmem:[%s337 + $0x2c] sm:$0xf]
        %v620 = vld [vmem:[%s337 + $0x30] sm:$0xf]
        %v621 = vld [vmem:[%s337 + $0x34] sm:$0xf]
        %v622 = vld [vmem:[%s337 + $0x38] sm:$0xf]
        %v623 = vld [vmem:[%s337 + $0x3c] sm:$0xf]
        %v624 = vpack.c.bf16 %v555, %v553
        %v625 = vpack.c.bf16 %v560, %v558
        %v626 = vpack.c.bf16 %v565, %v563
        %v627 = vpack.c.bf16 %v570, %v568
        %v628 = vpack.c.bf16 %v575, %v573
        %v629 = vpack.c.bf16 %v580, %v578
        %v630 = vpack.c.bf16 %v585, %v583
        %v631 = vpack.c.bf16 %v590, %v588
        %v648 = vunpack.c.l.b16 %v608
        %v649 = vunpack.c.l.b16 %v609
        %v650 = vunpack.c.l.b16 %v610
        %v651 = vunpack.c.l.b16 %v611
        %v652 = vunpack.c.l.b16 %v612
        %v653 = vunpack.c.l.b16 %v613
        %v654 = vunpack.c.l.b16 %v614
        %v655 = vunpack.c.l.b16 %v615
        %v656 = vunpack.c.l.b16 %v616
        %v657 = vunpack.c.l.b16 %v617
        %v658 = vunpack.c.l.b16 %v618
        %v659 = vunpack.c.l.b16 %v619
        %v660 = vunpack.c.l.b16 %v620
        %v661 = vunpack.c.l.b16 %v621
        %v662 = vunpack.c.l.b16 %v622
        %v663 = vunpack.c.l.b16 %v623
        %v664 = vpack.c.b16 %v649, %v648
        %v665 = vpack.c.b16 %v651, %v650
        %v666 = vpack.c.b16 %v653, %v652
        %v667 = vpack.c.b16 %v655, %v654
        %v668 = vpack.c.b16 %v657, %v656
        %v669 = vpack.c.b16 %v659, %v658
        %v670 = vpack.c.b16 %v661, %v660
        %v671 = vpack.c.b16 %v663, %v662
        %680 = vmatpush.bf16.msra.mxu0 %v631
        %681 = vmatpush.bf16.msra.mxu0 %v630
        %682 = vmatpush.bf16.msra.mxu0 %v629
        %683 = vmatpush.bf16.msra.mxu0 %v628
        %684 = vmatpush.bf16.msra.mxu0 %v627
        %685 = vmatpush.bf16.msra.mxu0 %v626
        %686 = vmatpush.bf16.msra.mxu0 %v625
        %687 = vmatpush.bf16.msra.mxu0 %v624
        %688 = vmatmul.bf16.gmra.mxu0 %v664
        %v689 = vpop.f32.mrf.mxu0
        %v690 = vadd.f32 0.0, %v689
        %v691 = vpop.f32.mrf.mxu0
        %v692 = vadd.f32 0.0, %v691
        %693 = vmatmul.bf16.gmra.mxu0 %v665
        %v694 = vpop.f32.mrf.mxu0
        %v695 = vadd.f32 0.0, %v694
        %v696 = vpop.f32.mrf.mxu0
        %v697 = vadd.f32 0.0, %v696
        %698 = vmatmul.bf16.gmra.mxu0 %v666
        %v699 = vpop.f32.mrf.mxu0
        %v700 = vadd.f32 0.0, %v699
        %v701 = vpop.f32.mrf.mxu0
        %v702 = vadd.f32 0.0, %v701
        %703 = vmatmul.bf16.gmra.mxu0 %v667
        %v704 = vpop.f32.mrf.mxu0
        %v705 = vadd.f32 0.0, %v704
        %v706 = vpop.f32.mrf.mxu0
        %v707 = vadd.f32 0.0, %v706
        %708 = vmatmul.bf16.gmra.mxu0 %v668
        %v709 = vpop.f32.mrf.mxu0
        %v710 = vadd.f32 0.0, %v709
        %v711 = vpop.f32.mrf.mxu0
        %v712 = vadd.f32 0.0, %v711
        %713 = vmatmul.bf16.gmra.mxu0 %v669
        %v714 = vpop.f32.mrf.mxu0
        %v715 = vadd.f32 0.0, %v714
        %v716 = vpop.f32.mrf.mxu0
        %v717 = vadd.f32 0.0, %v716
        %718 = vmatmul.bf16.gmra.mxu0 %v670
        %v719 = vpop.f32.mrf.mxu0
        %v720 = vadd.f32 0.0, %v719
        %v721 = vpop.f32.mrf.mxu0
        %v722 = vadd.f32 0.0, %v721
        %723 = vmatmul.bf16.gmra.mxu0 %v671
        %v724 = vpop.f32.mrf.mxu0
        %v725 = vadd.f32 0.0, %v724
        %v726 = vpop.f32.mrf.mxu0
        %v727 = vadd.f32 0.0, %v726
        %728 = vdwg.mxu0
        %v729 = vadd.f32 %v592, %v690
        %v730 = vadd.f32 %v593, %v692
        %v731 = vadd.f32 %v594, %v695
        %v732 = vadd.f32 %v595, %v697
        %v733 = vadd.f32 %v596, %v700
        %v734 = vadd.f32 %v597, %v702
        %v735 = vadd.f32 %v598, %v705
        %v736 = vadd.f32 %v599, %v707
        %v737 = vadd.f32 %v600, %v710
        %v738 = vadd.f32 %v601, %v712
        %v739 = vadd.f32 %v602, %v715
        %v740 = vadd.f32 %v603, %v717
        %v741 = vadd.f32 %v604, %v720
        %v742 = vadd.f32 %v605, %v722
        %v743 = vadd.f32 %v606, %v725
        %v744 = vadd.f32 %v607, %v727
        %745 = vst [vmem:[#allocation2] sm:$0xff] %v729
        %746 = vst [vmem:[#allocation2 + $0x8] sm:$0xff] %v730
        %747 = vst [vmem:[#allocation2 + $0x10] sm:$0xff] %v731
        %748 = vst [vmem:[#allocation2 + $0x18] sm:$0xff] %v732
        %749 = vst [vmem:[#allocation2 + $0x20] sm:$0xff] %v733
        %750 = vst [vmem:[#allocation2 + $0x28] sm:$0xff] %v734
        %751 = vst [vmem:[#allocation2 + $0x30] sm:$0xff] %v735
        %752 = vst [vmem:[#allocation2 + $0x38] sm:$0xff] %v736
        %753 = vst [vmem:[#allocation2 + $0x40] sm:$0xff] %v737
        %754 = vst [vmem:[#allocation2 + $0x48] sm:$0xff] %v738
        %755 = vst [vmem:[#allocation2 + $0x50] sm:$0xff] %v739
        %756 = vst [vmem:[#allocation2 + $0x58] sm:$0xff] %v740
        %757 = vst [vmem:[#allocation2 + $0x60] sm:$0xff] %v741
        %758 = vst [vmem:[#allocation2 + $0x68] sm:$0xff] %v742
        %759 = vst [vmem:[#allocation2 + $0x70] sm:$0xff] %v743
        %760 = vst [vmem:[#allocation2 + $0x78] sm:$0xff] %v744
        %p761 = scmp.eq.s32.totalorder %s21, 2
        // Predicated region
        $region86: #{hgnn_forward.2} parent=76 // pred_check
          %p762 = pneg %p761
        $region87: #{hgnn_forward.2} parent=76 // pred_check_branch
          %764 = sbr.rel (%p762) target = $region89
        $region88: #{hgnn_forward.2} parent=76 // pred_region
          %v765 = vld [vmem:[#allocation2] sm:$0xff]
          %v766 = vld [vmem:[#allocation2 + $0x8] sm:$0xff]
          %v767 = vld [vmem:[#allocation2 + $0x10] sm:$0xff]
          %v768 = vld [vmem:[#allocation2 + $0x18] sm:$0xff]
          %v769 = vld [vmem:[#allocation2 + $0x20] sm:$0xff]
          %v770 = vld [vmem:[#allocation2 + $0x28] sm:$0xff]
          %v771 = vld [vmem:[#allocation2 + $0x30] sm:$0xff]
          %v772 = vld [vmem:[#allocation2 + $0x38] sm:$0xff]
          %v773 = vld [vmem:[#allocation2 + $0x40] sm:$0xff]
          %v774 = vld [vmem:[#allocation2 + $0x48] sm:$0xff]
          %v775 = vld [vmem:[#allocation2 + $0x50] sm:$0xff]
          %v776 = vld [vmem:[#allocation2 + $0x58] sm:$0xff]
          %v777 = vld [vmem:[#allocation2 + $0x60] sm:$0xff]
          %v778 = vld [vmem:[#allocation2 + $0x68] sm:$0xff]
          %v779 = vld [vmem:[#allocation2 + $0x70] sm:$0xff]
          %v780 = vld [vmem:[#allocation2 + $0x78] sm:$0xff]
          %v781 = vmax.f32 %v765, 0.0
          %v782 = vmax.f32 %v766, 0.0
          %v783 = vmax.f32 %v767, 0.0
          %v784 = vmax.f32 %v768, 0.0
          %v785 = vmax.f32 %v769, 0.0
          %v786 = vmax.f32 %v770, 0.0
          %v787 = vmax.f32 %v771, 0.0
          %v788 = vmax.f32 %v772, 0.0
          %v789 = vmax.f32 %v773, 0.0
          %v790 = vmax.f32 %v774, 0.0
          %v791 = vmax.f32 %v775, 0.0
          %v792 = vmax.f32 %v776, 0.0
          %v793 = vmax.f32 %v777, 0.0
          %v794 = vmax.f32 %v778, 0.0
          %v795 = vmax.f32 %v779, 0.0
          %v796 = vmax.f32 %v780, 0.0
          %v797 = vld [vmem:[%s383] sm:$0xff]
          %v798 = vld [vmem:[%s383 + $0x8] sm:$0xff]
          %v799 = vld [vmem:[%s383 + $0x10] sm:$0xff]
          %v800 = vld [vmem:[%s383 + $0x18] sm:$0xff]
          %v801 = vld [vmem:[%s383 + $0x20] sm:$0xff]
          %v802 = vld [vmem:[%s383 + $0x28] sm:$0xff]
          %v803 = vld [vmem:[%s383 + $0x30] sm:$0xff]
          %v804 = vld [vmem:[%s383 + $0x38] sm:$0xff]
          %v805 = vld [vmem:[%s383 + $0x40] sm:$0xff]
          %v806 = vld [vmem:[%s383 + $0x48] sm:$0xff]
          %v807 = vld [vmem:[%s383 + $0x50] sm:$0xff]
          %v808 = vld [vmem:[%s383 + $0x58] sm:$0xff]
          %v809 = vld [vmem:[%s383 + $0x60] sm:$0xff]
          %v810 = vld [vmem:[%s383 + $0x68] sm:$0xff]
          %v811 = vld [vmem:[%s383 + $0x70] sm:$0xff]
          %v812 = vld [vmem:[%s383 + $0x78] sm:$0xff]
          %v813 = vmul.f32 %v781, %v797
          %v814 = vmul.f32 %v782, %v798
          %v815 = vmul.f32 %v783, %v799
          %v816 = vmul.f32 %v784, %v800
          %v817 = vmul.f32 %v785, %v801
          %v818 = vmul.f32 %v786, %v802
          %v819 = vmul.f32 %v787, %v803
          %v820 = vmul.f32 %v788, %v804
          %v821 = vmul.f32 %v789, %v805
          %v822 = vmul.f32 %v790, %v806
          %v823 = vmul.f32 %v791, %v807
          %v824 = vmul.f32 %v792, %v808
          %v825 = vmul.f32 %v793, %v809
          %v826 = vmul.f32 %v794, %v810
          %v827 = vmul.f32 %v795, %v811
          %v828 = vmul.f32 %v796, %v812
          %v829 = vpack.c.bf16 %v813, %v813
          %v830 = vpack.c.bf16 %v814, %v814
          %v831 = vpack.c.bf16 %v815, %v815
          %v832 = vpack.c.bf16 %v816, %v816
          %v833 = vpack.c.bf16 %v817, %v817
          %v834 = vpack.c.bf16 %v818, %v818
          %v835 = vpack.c.bf16 %v819, %v819
          %v836 = vpack.c.bf16 %v820, %v820
          %v837 = vpack.c.bf16 %v821, %v821
          %v838 = vpack.c.bf16 %v822, %v822
          %v839 = vpack.c.bf16 %v823, %v823
          %v840 = vpack.c.bf16 %v824, %v824
          %v841 = vpack.c.bf16 %v825, %v825
          %v842 = vpack.c.bf16 %v826, %v826
          %v843 = vpack.c.bf16 %v827, %v827
          %v844 = vpack.c.bf16 %v828, %v828
          %845 = vst [vmem:[%s389] sm:$0xf] %v829
          %846 = vst [vmem:[%s389 + $0x4] sm:$0xf] %v830
          %847 = vst [vmem:[%s389 + $0x8] sm:$0xf] %v831
          %848 = vst [vmem:[%s389 + $0xc] sm:$0xf] %v832
          %849 = vst [vmem:[%s389 + $0x10] sm:$0xf] %v833
          %850 = vst [vmem:[%s389 + $0x14] sm:$0xf] %v834
          %851 = vst [vmem:[%s389 + $0x18] sm:$0xf] %v835
          %852 = vst [vmem:[%s389 + $0x1c] sm:$0xf] %v836
          %853 = vst [vmem:[%s389 + $0x20] sm:$0xf] %v837
          %854 = vst [vmem:[%s389 + $0x24] sm:$0xf] %v838
          %855 = vst [vmem:[%s389 + $0x28] sm:$0xf] %v839
          %856 = vst [vmem:[%s389 + $0x2c] sm:$0xf] %v840
          %857 = vst [vmem:[%s389 + $0x30] sm:$0xf] %v841
          %858 = vst [vmem:[%s389 + $0x34] sm:$0xf] %v842
          %859 = vst [vmem:[%s389 + $0x38] sm:$0xf] %v843
          %860 = vst [vmem:[%s389 + $0x3c] sm:$0xf] %v844
        $region89: #{hgnn_forward.2} parent=76 // pred_fallthru
          _
        %s861 = smul.u32 16, %s20
        %p862 = scmp.lt.s32.totalorder %s861, 47
        %s863 = scalar_select %p862, %s861, 47
        %s864 = smul.addr %s863, 4
        %s865 = scalar_lea.vmem %s5, %s864
        // Predicated region
        $region90: #{hgnn_forward.2} parent=76 // pred_check
          %p866 = pneg %p168
        $region91: #{hgnn_forward.2} parent=76 // pred_check_branch
          %868 = sbr.rel (%p866) target = $region93
        $region92: #{hgnn_forward.2} parent=76 // pred_region
          %s869 = smul.u32 16, %s20
        $region93: #{hgnn_forward.2} parent=76 // pred_fallthru
          _
      $region77: #{hgnn_forward.2} parent=5 // pred_fallthru
        _
      %p870 = scmp.le.s32.totalorder 2, %s11
      // Predicated region
      $region94: #{hgnn_forward.2} parent=5 // pred_check
        %p871 = pneg %p870
      $region95: #{hgnn_forward.2} parent=5 // pred_check_branch
        %873 = sbr.rel (%p871) target = $region97
      $region96: #{hgnn_forward.2} parent=5 // pred_region
        %s874 = ssub.s32 %s11, 2
        // Predicated region
        $region98: #{hgnn_forward.2} parent=96 // pred_check
          %p875 = pneg %p174
        $region99: #{hgnn_forward.2} parent=96 // pred_check_branch
          %877 = sbr.rel (%p875) target = $region101
        $region100: #{hgnn_forward.2} parent=96 // pred_region
          %s878 = smul.u32 16, %s22
          %p879 = scmp.lt.s32.totalorder %s878, 47
          %s880 = scalar_select %p879, %s878, 47
          %s881 = smul.addr %s880, 4
          %s882 = scalar_lea.vmem %s5, %s881
        $region101: #{hgnn_forward.2} parent=96 // pred_fallthru
          _
      $region97: #{hgnn_forward.2} parent=5 // pred_fallthru
        _
    $region6: #{hgnn_forward.2} parent=1 // loop_footer
      %s15 = sadd.s32 1, %s11
    $region7: #{hgnn_forward.2} parent=1 // loop_footer_branch
      %10 = sbr.rel target = $region3
    $region8: #{hgnn_forward.2} parent=1 // loop_exit
      _

// kernel: hgnn_forward.3
$region0: #{hgnn_forward.3}
  #allocation0 [shape = 'u32[]', space=smem, size = 0x4, offset = 0x4, fixed_abs, tag = 'smem constant byte address 0x4 - core index']
  #allocation1 [shape = 'u32[72,128]{1,0:T(1,128)}', space=vmem, size = 0x9000, scoped, tag = 'internal scratch']
  #allocation2 [shape = 'f32[128,128]{1,0:T(8,128)}', space=vmem, size = 0x10000, scoped, tag = 'scratch operand']
  %s0 = inlined_call_operand.vmem [shape: bf16[384,384], index: 0, kind: input, shape index: {}]
  %s1 = inlined_call_operand.vmem [shape: bf16[384,128], index: 1, kind: input, shape index: {}]
  %s2 = inlined_call_operand.vmem [shape: bf16[128,128], index: 2, kind: input, shape index: {}]
  %s3 = inlined_call_operand.vmem [shape: f32[1,128], index: 3, kind: input, shape index: {}]
  %s4 = inlined_call_operand.vmem [shape: f32[384,128], index: 4, kind: output, shape index: {}]
  %s5 = sld [smem:[#allocation0]]
  $region98: #{hgnn_forward.3} parent=0
    _
  %s7 = ssub.s32 1, %s5
  %s8 = scalar_select 0, %s7, %s5
  $region1: #{hgnn_forward.3} parent=0
    #allocation3 [shape = 'u8[65536]{0}', space=vmem, size = 0x10000, scoped, tag = 'input window, operand 0']
    loop: start=0, step=1, limit=11
    $region2: #{hgnn_forward.3} parent=1 // loop_pre_header
      _
    $region3: #{hgnn_forward.3} parent=1 // loop_header
      %s10 = sphi 0, %s14
      %p11 = scmp.ge.s32.totalorder %s10, 11
      %s17 = sphi 0, %s29
      %s18 = sphi 0, %s25
      %s19 = sphi 0, %s17
      %s20 = sphi 0, %s18
      %s21 = sphi 0, %s19
      %s22 = sphi 0, %s20
      %s34 = sphi 0, %s36
      %s37 = sphi 0, %s34
      %s38 = sphi 0, %s37
      %s54 = sphi 0, %s38
      %s60 = sphi 0, %s62
      %s63 = sphi 0, %s60
      %s64 = sphi 0, %s63
      %s80 = sphi 0, %s64
      %s84 = sphi 0, %s84
      %s86 = sphi 0, %s84
      %s87 = sphi 0, %s86
      %s101 = sphi 0, %s87
      %s105 = sphi 0, %s105
      %s107 = sphi 0, %s105
      %s108 = sphi 0, %s107
      %s122 = sphi 0, %s108
      %s128 = sphi 0, %s130
      %s131 = sphi 0, %s128
      %s132 = sphi 0, %s131
      %s148 = sphi 0, %s132
    $region4: #{hgnn_forward.3} parent=1 // loop_header_branch
      %13 = sbr.rel (%p11) target = $region8
    $region5: #{hgnn_forward.3} parent=1 // loop_body
      %s15 = ssub.s32 %s10, 1
      %s16 = ssub.s32 %s10, 2
      %s23 = sadd.s32 1, %s18
      %p24 = scmp.ge.s32.totalorder %s23, 3
      %s25 = scalar_select %p24, 0, %s23
      %s26 = sadd.s32 1, %s17
      %s27 = scalar_select %p24, %s26, %s17
      %p28 = scmp.ge.s32.totalorder %s27, 3
      %s29 = scalar_select %p28, 0, %s27
      %s30 = ssub.s32 %s17, %s29
      %s31 = ssub.s32 %s18, %s25
      %s32 = sor.u32 %s30, %s31
      %p33 = scmp.eq.s32.totalorder %s32, 0
      %s35 = sadd.s32 %s34, 1
      %s36 = scalar_select %p33, %s34, %s35
      %p39 = pneg %p33
      %p40 = scmp.eq.s32.totalorder %s10, 8
      %p41 = por %p39, %p40
      %p42 = scmp.ne.s32.totalorder %s34, %s37
      %p43 = scmp.eq.s32.totalorder %s10, 0
      %p44 = por %p42, %p43
      %p45 = scmp.ne.s32.totalorder %s34, %s37
      %p46 = scmp.eq.s32.totalorder %s15, 8
      %p47 = por %p45, %p46
      %p48 = scmp.ne.s32.totalorder %s37, %s38
      %p49 = scmp.eq.s32.totalorder %s15, 0
      %p50 = por %p48, %p49
      %p51 = scmp.ne.s32.totalorder %s37, %s38
      %p52 = scmp.eq.s32.totalorder %s16, 8
      %p53 = por %p51, %p52
      %p55 = scmp.ne.s32.totalorder %s38, %s54
      %p56 = scmp.eq.s32.totalorder %s16, 0
      %p57 = por %p55, %p56
      %s58 = ssub.s32 %s18, %s25
      %p59 = scmp.eq.s32.totalorder %s58, 0
      %s61 = sadd.s32 %s60, 1
      %s62 = scalar_select %p59, %s60, %s61
      %p65 = pneg %p59
      %p66 = scmp.eq.s32.totalorder %s10, 8
      %p67 = por %p65, %p66
      %p68 = scmp.ne.s32.totalorder %s60, %s63
      %p69 = scmp.eq.s32.totalorder %s10, 0
      %p70 = por %p68, %p69
      %p71 = scmp.ne.s32.totalorder %s60, %s63
      %p72 = scmp.eq.s32.totalorder %s15, 8
      %p73 = por %p71, %p72
      %p74 = scmp.ne.s32.totalorder %s63, %s64
      %p75 = scmp.eq.s32.totalorder %s15, 0
      %p76 = por %p74, %p75
      %p77 = scmp.ne.s32.totalorder %s63, %s64
      %p78 = scmp.eq.s32.totalorder %s16, 8
      %p79 = por %p77, %p78
      %p81 = scmp.ne.s32.totalorder %s64, %s80
      %p82 = scmp.eq.s32.totalorder %s16, 0
      %p83 = por %p81, %p82
      %s85 = sadd.s32 %s84, 1
      %p88 = scmp.eq.s32.totalorder %s10, 8
      %p89 = scmp.ne.s32.totalorder %s84, %s86
      %p90 = scmp.eq.s32.totalorder %s10, 0
      %p91 = por %p89, %p90
      %p92 = scmp.ne.s32.totalorder %s84, %s86
      %p93 = scmp.eq.s32.totalorder %s15, 8
      %p94 = por %p92, %p93
      %p95 = scmp.ne.s32.totalorder %s86, %s87
      %p96 = scmp.eq.s32.totalorder %s15, 0
      %p97 = por %p95, %p96
      %p98 = scmp.ne.s32.totalorder %s86, %s87
      %p99 = scmp.eq.s32.totalorder %s16, 8
      %p100 = por %p98, %p99
      %p102 = scmp.ne.s32.totalorder %s87, %s101
      %p103 = scmp.eq.s32.totalorder %s16, 0
      %p104 = por %p102, %p103
      %s106 = sadd.s32 %s105, 1
      %p109 = scmp.eq.s32.totalorder %s10, 8
      %p110 = scmp.ne.s32.totalorder %s105, %s107
      %p111 = scmp.eq.s32.totalorder %s10, 0
      %p112 = por %p110, %p111
      %p113 = scmp.ne.s32.totalorder %s105, %s107
      %p114 = scmp.eq.s32.totalorder %s15, 8
      %p115 = por %p113, %p114
      %p116 = scmp.ne.s32.totalorder %s107, %s108
      %p117 = scmp.eq.s32.totalorder %s15, 0
      %p118 = por %p116, %p117
      %p119 = scmp.ne.s32.totalorder %s107, %s108
      %p120 = scmp.eq.s32.totalorder %s16, 8
      %p121 = por %p119, %p120
      %p123 = scmp.ne.s32.totalorder %s108, %s122
      %p124 = scmp.eq.s32.totalorder %s16, 0
      %p125 = por %p123, %p124
      %s126 = ssub.s32 %s17, %s29
      %p127 = scmp.eq.s32.totalorder %s126, 0
      %s129 = sadd.s32 %s128, 1
      %s130 = scalar_select %p127, %s128, %s129
      %p133 = pneg %p127
      %p134 = scmp.eq.s32.totalorder %s10, 8
      %p135 = por %p133, %p134
      %p136 = scmp.ne.s32.totalorder %s128, %s131
      %p137 = scmp.eq.s32.totalorder %s10, 0
      %p138 = por %p136, %p137
      %p139 = scmp.ne.s32.totalorder %s128, %s131
      %p140 = scmp.eq.s32.totalorder %s15, 8
      %p141 = por %p139, %p140
      %p142 = scmp.ne.s32.totalorder %s131, %s132
      %p143 = scmp.eq.s32.totalorder %s15, 0
      %p144 = por %p142, %p143
      %p145 = scmp.ne.s32.totalorder %s131, %s132
      %p146 = scmp.eq.s32.totalorder %s16, 8
      %p147 = por %p145, %p146
      %p149 = scmp.ne.s32.totalorder %s132, %s148
      %p150 = scmp.eq.s32.totalorder %s16, 0
      %p151 = por %p149, %p150
      %p152 = scmp.le.s32.totalorder 1, %s10
      %p153 = scmp.lt.s32.totalorder %s10, 10
      %p154 = pnand %p152, %p153
      %p155 = pneg %p154
      // Predicated region
      $region9: #{hgnn_forward.3} parent=5 // pred_check
        _
      $region10: #{hgnn_forward.3} parent=5 // pred_check_branch
        %157 = sbr.rel (%p154) target = $region12
      $region11: #{hgnn_forward.3} parent=5 // pred_region
        %s158 = ssub.s32 %s10, 1
        // Predicated region
        $region13: #{hgnn_forward.3} parent=11 // pred_check
          %p159 = pneg %p97
        $region14: #{hgnn_forward.3} parent=11 // pred_check_branch
          %161 = sbr.rel (%p159) target = $region16
        $region15: #{hgnn_forward.3} parent=11 // pred_region
          _
        $region16: #{hgnn_forward.3} parent=11 // pred_fallthru
          _
        // Predicated region
        $region17: #{hgnn_forward.3} parent=11 // pred_check
          %p162 = pneg %p118
        $region18: #{hgnn_forward.3} parent=11 // pred_check_branch
          %164 = sbr.rel (%p162) target = $region20
        $region19: #{hgnn_forward.3} parent=11 // pred_region
          _
        $region20: #{hgnn_forward.3} parent=11 // pred_fallthru
          _
      $region12: #{hgnn_forward.3} parent=5 // pred_fallthru
        _
      %p165 = scmp.lt.s32.totalorder %s10, 9
      // Predicated region
      $region21: #{hgnn_forward.3} parent=5 // pred_check
        %p166 = pneg %p165
      $region22: #{hgnn_forward.3} parent=5 // pred_check_branch
        %168 = sbr.rel (%p166) target = $region24
      $region23: #{hgnn_forward.3} parent=5 // pred_region
        // Predicated region
        $region25: #{hgnn_forward.3} parent=23 // pred_check
          %p169 = pneg %p44
        $region26: #{hgnn_forward.3} parent=23 // pred_check_branch
          %171 = sbr.rel (%p169) target = $region28
        $region27: #{hgnn_forward.3} parent=23 // pred_region
          %s172 = sand.u32 %s34, 1
          %s173 = sand.u32 %s34, 1
          %s174 = smul.addr %s173, 64
          %s175 = scalar_lea.vmem [#allocation3], %s174
          %s176 = smul.u32 16, %s17
          %s177 = smul.addr %s176, 3
          %s178 = sadd.s32 %s18, %s177
          %s179 = smul.addr %s178, 4
          %s180 = scalar_lea.vmem %s0, %s179
          // Predicated region
          $region29: #{hgnn_forward.3} parent=27 // pred_check
            _
          $region30: #{hgnn_forward.3} parent=27 // pred_check_branch
            %182 = sbr.rel (0) target = $region32
          $region31: #{hgnn_forward.3} parent=27 // pred_region
            // Predicated region
            $region33: #{hgnn_forward.3} parent=31 // pred_check
              _
            $region34: #{hgnn_forward.3} parent=31 // pred_check_branch
              %184 = sbr.rel target = $region36
            $region35: #{hgnn_forward.3} parent=31 // pred_region
              // Predicated region
              $region48: #{hgnn_forward.3} parent=35 // pred_check
                _
              $region49: #{hgnn_forward.3} parent=35 // pred_check_branch
                %230 = sbr.rel (0) target = $region51
              $region50: #{hgnn_forward.3} parent=35 // pred_region
                loop: start=0, step=1, limit=1
                $region52: #{hgnn_forward.3} parent=50 // loop_pre_header
                  _
                $region53: #{hgnn_forward.3} parent=50 // loop_header
                  %s232 = sphi 0, %s236
                  %p233 = scmp.ge.s32.totalorder %s232, 1
                  %s237 = sphi %s180, %s180
                  %s238 = sphi %s175, %s175
                $region54: #{hgnn_forward.3} parent=50 // loop_header_branch
                  %235 = sbr.rel (%p233) target = $region58
                $region55: #{hgnn_forward.3} parent=50 // loop_body
                  _
                $region56: #{hgnn_forward.3} parent=50 // loop_footer
                  %s236 = sadd.s32 1, %s232
                $region57: #{hgnn_forward.3} parent=50 // loop_footer_branch
                  %231 = sbr.rel target = $region53
                $region58: #{hgnn_forward.3} parent=50 // loop_exit
                  _
                %s240 = ssub.s32 16, 1
                loop: start=0, step=1, limit=1
                $region59: #{hgnn_forward.3} parent=50 // loop_pre_header
                  _
                $region60: #{hgnn_forward.3} parent=50 // loop_header
                  %s242 = sphi 0, %s246
                  %p243 = scmp.ge.s32.totalorder %s242, 1
                  %s247 = sphi %s180, %s180
                  %s248 = sphi %s175, %s175
                $region61: #{hgnn_forward.3} parent=50 // loop_header_branch
                  %245 = sbr.rel (%p243) target = $region65
                $region62: #{hgnn_forward.3} parent=50 // loop_body
                  %v249 = vld [vmem:[%s247] sm:%s240]
                  %250 = vst [vmem:[%s248] sm:%s240] %v249
                  %v251 = vld [vmem:[%s247 + $0xc] sm:%s240]
                  %252 = vst [vmem:[%s248 + $0x4] sm:%s240] %v251
                  %v253 = vld [vmem:[%s247 + $0x18] sm:%s240]
                  %254 = vst [vmem:[%s248 + $0x8] sm:%s240] %v253
                  %v255 = vld [vmem:[%s247 + $0x24] sm:%s240]
                  %256 = vst [vmem:[%s248 + $0xc] sm:%s240] %v255
                  %v257 = vld [vmem:[%s247 + $0x30] sm:%s240]
                  %258 = vst [vmem:[%s248 + $0x10] sm:%s240] %v257
                  %v259 = vld [vmem:[%s247 + $0x3c] sm:%s240]
                  %260 = vst [vmem:[%s248 + $0x14] sm:%s240] %v259
                  %v261 = vld [vmem:[%s247 + $0x48] sm:%s240]
                  %262 = vst [vmem:[%s248 + $0x18] sm:%s240] %v261
                  %v263 = vld [vmem:[%s247 + $0x54] sm:%s240]
                  %264 = vst [vmem:[%s248 + $0x1c] sm:%s240] %v263
                  %v265 = vld [vmem:[%s247 + $0x60] sm:%s240]
                  %266 = vst [vmem:[%s248 + $0x20] sm:%s240] %v265
                  %v267 = vld [vmem:[%s247 + $0x6c] sm:%s240]
                  %268 = vst [vmem:[%s248 + $0x24] sm:%s240] %v267
                  %v269 = vld [vmem:[%s247 + $0x78] sm:%s240]
                  %270 = vst [vmem:[%s248 + $0x28] sm:%s240] %v269
                  %v271 = vld [vmem:[%s247 + $0x84] sm:%s240]
                  %272 = vst [vmem:[%s248 + $0x2c] sm:%s240] %v271
                  %v273 = vld [vmem:[%s247 + $0x90] sm:%s240]
                  %274 = vst [vmem:[%s248 + $0x30] sm:%s240] %v273
                  %v275 = vld [vmem:[%s247 + $0x9c] sm:%s240]
                  %276 = vst [vmem:[%s248 + $0x34] sm:%s240] %v275
                  %v277 = vld [vmem:[%s247 + $0xa8] sm:%s240]
                  %278 = vst [vmem:[%s248 + $0x38] sm:%s240] %v277
                  %v279 = vld [vmem:[%s247 + $0xb4] sm:%s240]
                  %280 = vst [vmem:[%s248 + $0x3c] sm:%s240] %v279
                $region63: #{hgnn_forward.3} parent=50 // loop_footer
                  %s246 = sadd.s32 1, %s242
                $region64: #{hgnn_forward.3} parent=50 // loop_footer_branch
                  %241 = sbr.rel target = $region60
                $region65: #{hgnn_forward.3} parent=50 // loop_exit
                  _
              $region51: #{hgnn_forward.3} parent=35 // pred_fallthru
                _
            $region36: #{hgnn_forward.3} parent=31 // pred_fallthru
              _
            // Predicated region
            $region37: #{hgnn_forward.3} parent=31 // pred_check
              _
            $region38: #{hgnn_forward.3} parent=31 // pred_check_branch
              %186 = sbr.rel (0) target = $region40
            $region39: #{hgnn_forward.3} parent=31 // pred_region
              %s188 = ssub.s32 16, 1
              loop: start=0, step=1, limit=1
              $region41: #{hgnn_forward.3} parent=39 // loop_pre_header
                _
              $region42: #{hgnn_forward.3} parent=39 // loop_header
                %s190 = sphi 0, %s194
                %p191 = scmp.ge.s32.totalorder %s190, 1
                %s195 = sphi %s180, %s180
                %s196 = sphi %s175, %s175
              $region43: #{hgnn_forward.3} parent=39 // loop_header_branch
                %193 = sbr.rel (%p191) target = $region47
              $region44: #{hgnn_forward.3} parent=39 // loop_body
                %v197 = vld [vmem:[%s195] sm:%s188]
                %198 = vst [vmem:[%s196] sm:%s188] %v197
                %v199 = vld [vmem:[%s195 + $0xc] sm:%s188]
                %200 = vst [vmem:[%s196 + $0x4] sm:%s188] %v199
                %v201 = vld [vmem:[%s195 + $0x18] sm:%s188]
                %202 = vst [vmem:[%s196 + $0x8] sm:%s188] %v201
                %v203 = vld [vmem:[%s195 + $0x24] sm:%s188]
                %204 = vst [vmem:[%s196 + $0xc] sm:%s188] %v203
                %v205 = vld [vmem:[%s195 + $0x30] sm:%s188]
                %206 = vst [vmem:[%s196 + $0x10] sm:%s188] %v205
                %v207 = vld [vmem:[%s195 + $0x3c] sm:%s188]
                %208 = vst [vmem:[%s196 + $0x14] sm:%s188] %v207
                %v209 = vld [vmem:[%s195 + $0x48] sm:%s188]
                %210 = vst [vmem:[%s196 + $0x18] sm:%s188] %v209
                %v211 = vld [vmem:[%s195 + $0x54] sm:%s188]
                %212 = vst [vmem:[%s196 + $0x1c] sm:%s188] %v211
                %v213 = vld [vmem:[%s195 + $0x60] sm:%s188]
                %214 = vst [vmem:[%s196 + $0x20] sm:%s188] %v213
                %v215 = vld [vmem:[%s195 + $0x6c] sm:%s188]
                %216 = vst [vmem:[%s196 + $0x24] sm:%s188] %v215
                %v217 = vld [vmem:[%s195 + $0x78] sm:%s188]
                %218 = vst [vmem:[%s196 + $0x28] sm:%s188] %v217
                %v219 = vld [vmem:[%s195 + $0x84] sm:%s188]
                %220 = vst [vmem:[%s196 + $0x2c] sm:%s188] %v219
                %v221 = vld [vmem:[%s195 + $0x90] sm:%s188]
                %222 = vst [vmem:[%s196 + $0x30] sm:%s188] %v221
                %v223 = vld [vmem:[%s195 + $0x9c] sm:%s188]
                %224 = vst [vmem:[%s196 + $0x34] sm:%s188] %v223
                %v225 = vld [vmem:[%s195 + $0xa8] sm:%s188]
                %226 = vst [vmem:[%s196 + $0x38] sm:%s188] %v225
                %v227 = vld [vmem:[%s195 + $0xb4] sm:%s188]
                %228 = vst [vmem:[%s196 + $0x3c] sm:%s188] %v227
              $region45: #{hgnn_forward.3} parent=39 // loop_footer
                %s194 = sadd.s32 1, %s190
              $region46: #{hgnn_forward.3} parent=39 // loop_footer_branch
                %189 = sbr.rel target = $region42
              $region47: #{hgnn_forward.3} parent=39 // loop_exit
                _
            $region40: #{hgnn_forward.3} parent=31 // pred_fallthru
              _
          $region32: #{hgnn_forward.3} parent=27 // pred_fallthru
            _
          %281 = vnop
        $region28: #{hgnn_forward.3} parent=23 // pred_fallthru
          _
        // Predicated region
        $region66: #{hgnn_forward.3} parent=23 // pred_check
          %p282 = pneg %p70
        $region67: #{hgnn_forward.3} parent=23 // pred_check_branch
          %284 = sbr.rel (%p282) target = $region69
        $region68: #{hgnn_forward.3} parent=23 // pred_region
          %s285 = smul.u32 16, %s18
          %p286 = scmp.lt.s32.totalorder %s285, 47
          %s287 = scalar_select %p286, %s285, 47
          %s288 = smul.addr %s287, 4
          %s289 = scalar_lea.vmem %s1, %s288
          %s290 = smul.u32 16, %s18
        $region69: #{hgnn_forward.3} parent=23 // pred_fallthru
          _
      $region24: #{hgnn_forward.3} parent=5 // pred_fallthru
        _
      %p291 = scmp.le.s32.totalorder 1, %s10
      %p292 = scmp.lt.s32.totalorder %s10, 10
      %p293 = pnand %p291, %p292
      %p294 = pneg %p293
      // Predicated region
      $region70: #{hgnn_forward.3} parent=5 // pred_check
        _
      $region71: #{hgnn_forward.3} parent=5 // pred_check_branch
        %296 = sbr.rel (%p293) target = $region73
      $region72: #{hgnn_forward.3} parent=5 // pred_region
        %s297 = ssub.s32 %s10, 1
        %s298 = sand.u32 %s37, 1
        %s299 = sand.u32 %s37, 1
        %s300 = smul.addr %s299, 64
        %s301 = scalar_lea.vmem [#allocation3], %s300
        // Predicated region
        $region74: #{hgnn_forward.3} parent=72 // pred_check
          %p302 = pneg %p50
        $region75: #{hgnn_forward.3} parent=72 // pred_check_branch
          %304 = sbr.rel (%p302) target = $region77
        $region76: #{hgnn_forward.3} parent=72 // pred_region
          _
        $region77: #{hgnn_forward.3} parent=72 // pred_fallthru
          _
        %s305 = sand.u32 %s37, 1
        %s306 = sand.u32 %s37, 1
        %s307 = smul.addr %s306, 64
        %s308 = scalar_lea.vmem [#allocation3], %s307
        %p309 = pneg %p50
        %p310 = pneg %p47
        %s311 = smul.u32 16, %s20
        %p312 = scmp.lt.s32.totalorder %s311, 47
        %s313 = scalar_select %p312, %s311, 47
        %s314 = smul.addr %s313, 4
        %s315 = scalar_lea.vmem %s1, %s314
        %p316 = pneg %p76
        %p317 = pneg %p73
        %p318 = pneg %p97
        %p319 = pneg %p94
        %p320 = pneg %p118
        %p321 = pneg %p115
        %p322 = pneg %p144
        %p323 = pneg %p141
        %s324 = smul.u32 16, %s19
        %p325 = scmp.lt.s32.totalorder %s324, 47
        %s326 = scalar_select %p325, %s324, 47
        %s327 = smul.addr %s326, 8
        %s328 = scalar_lea.vmem %s4, %s327
        %s329 = smul.u32 16, %s19
        %s330 = smul.u32 16, %s20
        %p331 = scmp.lt.s32.totalorder %s330, 47
        %s332 = scalar_select %p331, %s330, 47
        %s333 = smul.addr %s332, 4
        %s334 = scalar_lea.vmem %s1, %s333
        %s335 = smul.u32 16, %s20
        %s336 = smul.u32 16, %s19
        %p337 = scmp.lt.s32.totalorder %s336, 47
        %s338 = scalar_select %p337, %s336, 47
        %s339 = smul.addr %s338, 8
        %s340 = scalar_lea.vmem %s4, %s339
        %s341 = smul.u32 16, %s19
        %p342 = scmp.eq.s32.totalorder %s20, 0
        // Predicated region
        $region78: #{hgnn_forward.3} parent=72 // pred_check
          %p343 = pneg %p342
        $region79: #{hgnn_forward.3} parent=72 // pred_check_branch
          %345 = sbr.rel (%p343) target = $region81
        $region80: #{hgnn_forward.3} parent=72 // pred_region
          %346 = vst [vmem:[#allocation2] sm:$0xff] 0.0
          %347 = vst [vmem:[#allocation2 + $0x8] sm:$0xff] 0.0
          %348 = vst [vmem:[#allocation2 + $0x10] sm:$0xff] 0.0
          %349 = vst [vmem:[#allocation2 + $0x18] sm:$0xff] 0.0
          %350 = vst [vmem:[#allocation2 + $0x20] sm:$0xff] 0.0
          %351 = vst [vmem:[#allocation2 + $0x28] sm:$0xff] 0.0
          %352 = vst [vmem:[#allocation2 + $0x30] sm:$0xff] 0.0
          %353 = vst [vmem:[#allocation2 + $0x38] sm:$0xff] 0.0
          %354 = vst [vmem:[#allocation2 + $0x40] sm:$0xff] 0.0
          %355 = vst [vmem:[#allocation2 + $0x48] sm:$0xff] 0.0
          %356 = vst [vmem:[#allocation2 + $0x50] sm:$0xff] 0.0
          %357 = vst [vmem:[#allocation2 + $0x58] sm:$0xff] 0.0
          %358 = vst [vmem:[#allocation2 + $0x60] sm:$0xff] 0.0
          %359 = vst [vmem:[#allocation2 + $0x68] sm:$0xff] 0.0
          %360 = vst [vmem:[#allocation2 + $0x70] sm:$0xff] 0.0
          %361 = vst [vmem:[#allocation2 + $0x78] sm:$0xff] 0.0
        $region81: #{hgnn_forward.3} parent=72 // pred_fallthru
          _
        %v362 = vld [vmem:[%s334] sm:$0xf]
        %v363 = vld [vmem:[%s334 + $0x4] sm:$0xf]
        %v364 = vld [vmem:[%s334 + $0x8] sm:$0xf]
        %v365 = vld [vmem:[%s334 + $0xc] sm:$0xf]
        %v366 = vld [vmem:[%s334 + $0x10] sm:$0xf]
        %v367 = vld [vmem:[%s334 + $0x14] sm:$0xf]
        %v368 = vld [vmem:[%s334 + $0x18] sm:$0xf]
        %v369 = vld [vmem:[%s334 + $0x1c] sm:$0xf]
        %v370 = vld [vmem:[%s334 + $0x20] sm:$0xf]
        %v371 = vld [vmem:[%s334 + $0x24] sm:$0xf]
        %v372 = vld [vmem:[%s334 + $0x28] sm:$0xf]
        %v373 = vld [vmem:[%s334 + $0x2c] sm:$0xf]
        %v374 = vld [vmem:[%s334 + $0x30] sm:$0xf]
        %v375 = vld [vmem:[%s334 + $0x34] sm:$0xf]
        %v376 = vld [vmem:[%s334 + $0x38] sm:$0xf]
        %v377 = vld [vmem:[%s334 + $0x3c] sm:$0xf]
        %v378 = vld [vmem:[%s2] sm:$0xf]
        %v379 = vld [vmem:[%s2 + $0x4] sm:$0xf]
        %v380 = vld [vmem:[%s2 + $0x8] sm:$0xf]
        %v381 = vld [vmem:[%s2 + $0xc] sm:$0xf]
        %v382 = vld [vmem:[%s2 + $0x10] sm:$0xf]
        %v383 = vld [vmem:[%s2 + $0x14] sm:$0xf]
        %v384 = vld [vmem:[%s2 + $0x18] sm:$0xf]
        %v385 = vld [vmem:[%s2 + $0x1c] sm:$0xf]
        %v386 = vld [vmem:[%s2 + $0x20] sm:$0xf]
        %v387 = vld [vmem:[%s2 + $0x24] sm:$0xf]
        %v388 = vld [vmem:[%s2 + $0x28] sm:$0xf]
        %v389 = vld [vmem:[%s2 + $0x2c] sm:$0xf]
        %v390 = vld [vmem:[%s2 + $0x30] sm:$0xf]
        %v391 = vld [vmem:[%s2 + $0x34] sm:$0xf]
        %v392 = vld [vmem:[%s2 + $0x38] sm:$0xf]
        %v393 = vld [vmem:[%s2 + $0x3c] sm:$0xf]
        %v394 = vld [vmem:[%s3] sm:$0x1]
        %v396 = vperm.slane %v394, 0
        %v414 = vunpack.c.l.b16 %v362
        %v415 = vunpack.c.l.b16 %v363
        %v416 = vunpack.c.l.b16 %v364
        %v417 = vunpack.c.l.b16 %v365
        %v418 = vunpack.c.l.b16 %v366
        %v419 = vunpack.c.l.b16 %v367
        %v420 = vunpack.c.l.b16 %v368
        %v421 = vunpack.c.l.b16 %v369
        %v422 = vunpack.c.l.b16 %v370
        %v423 = vunpack.c.l.b16 %v371
        %v424 = vunpack.c.l.b16 %v372
        %v425 = vunpack.c.l.b16 %v373
        %v426 = vunpack.c.l.b16 %v374
        %v427 = vunpack.c.l.b16 %v375
        %v428 = vunpack.c.l.b16 %v376
        %v429 = vunpack.c.l.b16 %v377
        %v430 = vpack.c.b16 %v415, %v414
        %v431 = vpack.c.b16 %v417, %v416
        %v432 = vpack.c.b16 %v419, %v418
        %v433 = vpack.c.b16 %v421, %v420
        %v434 = vpack.c.b16 %v423, %v422
        %v435 = vpack.c.b16 %v425, %v424
        %v436 = vpack.c.b16 %v427, %v426
        %v437 = vpack.c.b16 %v429, %v428
        %v462 = vunpack.c.l.b16 %v378
        %v463 = vunpack.c.l.b16 %v379
        %v464 = vunpack.c.l.b16 %v380
        %v465 = vunpack.c.l.b16 %v381
        %v466 = vunpack.c.l.b16 %v382
        %v467 = vunpack.c.l.b16 %v383
        %v468 = vunpack.c.l.b16 %v384
        %v469 = vunpack.c.l.b16 %v385
        %v470 = vunpack.c.l.b16 %v386
        %v471 = vunpack.c.l.b16 %v387
        %v472 = vunpack.c.l.b16 %v388
        %v473 = vunpack.c.l.b16 %v389
        %v474 = vunpack.c.l.b16 %v390
        %v475 = vunpack.c.l.b16 %v391
        %v476 = vunpack.c.l.b16 %v392
        %v477 = vunpack.c.l.b16 %v393
        %v478 = vpack.c.b16 %v463, %v462
        %v479 = vpack.c.b16 %v465, %v464
        %v480 = vpack.c.b16 %v467, %v466
        %v481 = vpack.c.b16 %v469, %v468
        %v482 = vpack.c.b16 %v471, %v470
        %v483 = vpack.c.b16 %v473, %v472
        %v484 = vpack.c.b16 %v475, %v474
        %v485 = vpack.c.b16 %v477, %v476
        %494 = vmatpush.bf16.msra.mxu0 %v485
        %495 = vmatpush.bf16.msra.mxu0 %v484
        %496 = vmatpush.bf16.msra.mxu0 %v483
        %497 = vmatpush.bf16.msra.mxu0 %v482
        %498 = vmatpush.bf16.msra.mxu0 %v481
        %499 = vmatpush.bf16.msra.mxu0 %v480
        %500 = vmatpush.bf16.msra.mxu0 %v479
        %501 = vmatpush.bf16.msra.mxu0 %v478
        %502 = vmatmul.bf16.gmra.mxu0 %v430
        %v503 = vpop.f32.mrf.mxu0
        %v504 = vadd.f32 %v396, %v503
        %v505 = vpop.f32.mrf.mxu0
        %v506 = vadd.f32 %v396, %v505
        %507 = vmatmul.bf16.gmra.mxu0 %v431
        %v508 = vpop.f32.mrf.mxu0
        %v509 = vadd.f32 %v396, %v508
        %v510 = vpop.f32.mrf.mxu0
        %v511 = vadd.f32 %v396, %v510
        %512 = vmatmul.bf16.gmra.mxu0 %v432
        %v513 = vpop.f32.mrf.mxu0
        %v514 = vadd.f32 %v396, %v513
        %v515 = vpop.f32.mrf.mxu0
        %v516 = vadd.f32 %v396, %v515
        %517 = vmatmul.bf16.gmra.mxu0 %v433
        %v518 = vpop.f32.mrf.mxu0
        %v519 = vadd.f32 %v396, %v518
        %v520 = vpop.f32.mrf.mxu0
        %v521 = vadd.f32 %v396, %v520
        %522 = vmatmul.bf16.gmra.mxu0 %v434
        %v523 = vpop.f32.mrf.mxu0
        %v524 = vadd.f32 %v396, %v523
        %v525 = vpop.f32.mrf.mxu0
        %v526 = vadd.f32 %v396, %v525
        %527 = vmatmul.bf16.gmra.mxu0 %v435
        %v528 = vpop.f32.mrf.mxu0
        %v529 = vadd.f32 %v396, %v528
        %v530 = vpop.f32.mrf.mxu0
        %v531 = vadd.f32 %v396, %v530
        %532 = vmatmul.bf16.gmra.mxu0 %v436
        %v533 = vpop.f32.mrf.mxu0
        %v534 = vadd.f32 %v396, %v533
        %v535 = vpop.f32.mrf.mxu0
        %v536 = vadd.f32 %v396, %v535
        %537 = vmatmul.bf16.gmra.mxu0 %v437
        %v538 = vpop.f32.mrf.mxu0
        %v539 = vadd.f32 %v396, %v538
        %v540 = vpop.f32.mrf.mxu0
        %v541 = vadd.f32 %v396, %v540
        %542 = vdwg.mxu0
        %v543 = vld [vmem:[#allocation2] sm:$0xff]
        %v544 = vld [vmem:[#allocation2 + $0x8] sm:$0xff]
        %v545 = vld [vmem:[#allocation2 + $0x10] sm:$0xff]
        %v546 = vld [vmem:[#allocation2 + $0x18] sm:$0xff]
        %v547 = vld [vmem:[#allocation2 + $0x20] sm:$0xff]
        %v548 = vld [vmem:[#allocation2 + $0x28] sm:$0xff]
        %v549 = vld [vmem:[#allocation2 + $0x30] sm:$0xff]
        %v550 = vld [vmem:[#allocation2 + $0x38] sm:$0xff]
        %v551 = vld [vmem:[#allocation2 + $0x40] sm:$0xff]
        %v552 = vld [vmem:[#allocation2 + $0x48] sm:$0xff]
        %v553 = vld [vmem:[#allocation2 + $0x50] sm:$0xff]
        %v554 = vld [vmem:[#allocation2 + $0x58] sm:$0xff]
        %v555 = vld [vmem:[#allocation2 + $0x60] sm:$0xff]
        %v556 = vld [vmem:[#allocation2 + $0x68] sm:$0xff]
        %v557 = vld [vmem:[#allocation2 + $0x70] sm:$0xff]
        %v558 = vld [vmem:[#allocation2 + $0x78] sm:$0xff]
        %v559 = vld [vmem:[%s301] sm:$0xf]
        %v560 = vld [vmem:[%s301 + $0x4] sm:$0xf]
        %v561 = vld [vmem:[%s301 + $0x8] sm:$0xf]
        %v562 = vld [vmem:[%s301 + $0xc] sm:$0xf]
        %v563 = vld [vmem:[%s301 + $0x10] sm:$0xf]
        %v564 = vld [vmem:[%s301 + $0x14] sm:$0xf]
        %v565 = vld [vmem:[%s301 + $0x18] sm:$0xf]
        %v566 = vld [vmem:[%s301 + $0x1c] sm:$0xf]
        %v567 = vld [vmem:[%s301 + $0x20] sm:$0xf]
        %v568 = vld [vmem:[%s301 + $0x24] sm:$0xf]
        %v569 = vld [vmem:[%s301 + $0x28] sm:$0xf]
        %v570 = vld [vmem:[%s301 + $0x2c] sm:$0xf]
        %v571 = vld [vmem:[%s301 + $0x30] sm:$0xf]
        %v572 = vld [vmem:[%s301 + $0x34] sm:$0xf]
        %v573 = vld [vmem:[%s301 + $0x38] sm:$0xf]
        %v574 = vld [vmem:[%s301 + $0x3c] sm:$0xf]
        %v575 = vpack.c.bf16 %v506, %v504
        %v576 = vpack.c.bf16 %v511, %v509
        %v577 = vpack.c.bf16 %v516, %v514
        %v578 = vpack.c.bf16 %v521, %v519
        %v579 = vpack.c.bf16 %v526, %v524
        %v580 = vpack.c.bf16 %v531, %v529
        %v581 = vpack.c.bf16 %v536, %v534
        %v582 = vpack.c.bf16 %v541, %v539
        %v599 = vunpack.c.l.b16 %v559
        %v600 = vunpack.c.l.b16 %v560
        %v601 = vunpack.c.l.b16 %v561
        %v602 = vunpack.c.l.b16 %v562
        %v603 = vunpack.c.l.b16 %v563
        %v604 = vunpack.c.l.b16 %v564
        %v605 = vunpack.c.l.b16 %v565
        %v606 = vunpack.c.l.b16 %v566
        %v607 = vunpack.c.l.b16 %v567
        %v608 = vunpack.c.l.b16 %v568
        %v609 = vunpack.c.l.b16 %v569
        %v610 = vunpack.c.l.b16 %v570
        %v611 = vunpack.c.l.b16 %v571
        %v612 = vunpack.c.l.b16 %v572
        %v613 = vunpack.c.l.b16 %v573
        %v614 = vunpack.c.l.b16 %v574
        %v615 = vpack.c.b16 %v600, %v599
        %v616 = vpack.c.b16 %v602, %v601
        %v617 = vpack.c.b16 %v604, %v603
        %v618 = vpack.c.b16 %v606, %v605
        %v619 = vpack.c.b16 %v608, %v607
        %v620 = vpack.c.b16 %v610, %v609
        %v621 = vpack.c.b16 %v612, %v611
        %v622 = vpack.c.b16 %v614, %v613
        %631 = vmatpush.bf16.msra.mxu0 %v582
        %632 = vmatpush.bf16.msra.mxu0 %v581
        %633 = vmatpush.bf16.msra.mxu0 %v580
        %634 = vmatpush.bf16.msra.mxu0 %v579
        %635 = vmatpush.bf16.msra.mxu0 %v578
        %636 = vmatpush.bf16.msra.mxu0 %v577
        %637 = vmatpush.bf16.msra.mxu0 %v576
        %638 = vmatpush.bf16.msra.mxu0 %v575
        %639 = vmatmul.bf16.gmra.mxu0 %v615
        %v640 = vpop.f32.mrf.mxu0
        %v641 = vadd.f32 0.0, %v640
        %v642 = vpop.f32.mrf.mxu0
        %v643 = vadd.f32 0.0, %v642
        %644 = vmatmul.bf16.gmra.mxu0 %v616
        %v645 = vpop.f32.mrf.mxu0
        %v646 = vadd.f32 0.0, %v645
        %v647 = vpop.f32.mrf.mxu0
        %v648 = vadd.f32 0.0, %v647
        %649 = vmatmul.bf16.gmra.mxu0 %v617
        %v650 = vpop.f32.mrf.mxu0
        %v651 = vadd.f32 0.0, %v650
        %v652 = vpop.f32.mrf.mxu0
        %v653 = vadd.f32 0.0, %v652
        %654 = vmatmul.bf16.gmra.mxu0 %v618
        %v655 = vpop.f32.mrf.mxu0
        %v656 = vadd.f32 0.0, %v655
        %v657 = vpop.f32.mrf.mxu0
        %v658 = vadd.f32 0.0, %v657
        %659 = vmatmul.bf16.gmra.mxu0 %v619
        %v660 = vpop.f32.mrf.mxu0
        %v661 = vadd.f32 0.0, %v660
        %v662 = vpop.f32.mrf.mxu0
        %v663 = vadd.f32 0.0, %v662
        %664 = vmatmul.bf16.gmra.mxu0 %v620
        %v665 = vpop.f32.mrf.mxu0
        %v666 = vadd.f32 0.0, %v665
        %v667 = vpop.f32.mrf.mxu0
        %v668 = vadd.f32 0.0, %v667
        %669 = vmatmul.bf16.gmra.mxu0 %v621
        %v670 = vpop.f32.mrf.mxu0
        %v671 = vadd.f32 0.0, %v670
        %v672 = vpop.f32.mrf.mxu0
        %v673 = vadd.f32 0.0, %v672
        %674 = vmatmul.bf16.gmra.mxu0 %v622
        %v675 = vpop.f32.mrf.mxu0
        %v676 = vadd.f32 0.0, %v675
        %v677 = vpop.f32.mrf.mxu0
        %v678 = vadd.f32 0.0, %v677
        %679 = vdwg.mxu0
        %v680 = vadd.f32 %v543, %v641
        %v681 = vadd.f32 %v544, %v643
        %v682 = vadd.f32 %v545, %v646
        %v683 = vadd.f32 %v546, %v648
        %v684 = vadd.f32 %v547, %v651
        %v685 = vadd.f32 %v548, %v653
        %v686 = vadd.f32 %v549, %v656
        %v687 = vadd.f32 %v550, %v658
        %v688 = vadd.f32 %v551, %v661
        %v689 = vadd.f32 %v552, %v663
        %v690 = vadd.f32 %v553, %v666
        %v691 = vadd.f32 %v554, %v668
        %v692 = vadd.f32 %v555, %v671
        %v693 = vadd.f32 %v556, %v673
        %v694 = vadd.f32 %v557, %v676
        %v695 = vadd.f32 %v558, %v678
        %696 = vst [vmem:[#allocation2] sm:$0xff] %v680
        %697 = vst [vmem:[#allocation2 + $0x8] sm:$0xff] %v681
        %698 = vst [vmem:[#allocation2 + $0x10] sm:$0xff] %v682
        %699 = vst [vmem:[#allocation2 + $0x18] sm:$0xff] %v683
        %700 = vst [vmem:[#allocation2 + $0x20] sm:$0xff] %v684
        %701 = vst [vmem:[#allocation2 + $0x28] sm:$0xff] %v685
        %702 = vst [vmem:[#allocation2 + $0x30] sm:$0xff] %v686
        %703 = vst [vmem:[#allocation2 + $0x38] sm:$0xff] %v687
        %704 = vst [vmem:[#allocation2 + $0x40] sm:$0xff] %v688
        %705 = vst [vmem:[#allocation2 + $0x48] sm:$0xff] %v689
        %706 = vst [vmem:[#allocation2 + $0x50] sm:$0xff] %v690
        %707 = vst [vmem:[#allocation2 + $0x58] sm:$0xff] %v691
        %708 = vst [vmem:[#allocation2 + $0x60] sm:$0xff] %v692
        %709 = vst [vmem:[#allocation2 + $0x68] sm:$0xff] %v693
        %710 = vst [vmem:[#allocation2 + $0x70] sm:$0xff] %v694
        %711 = vst [vmem:[#allocation2 + $0x78] sm:$0xff] %v695
        %p712 = scmp.eq.s32.totalorder %s20, 2
        // Predicated region
        $region82: #{hgnn_forward.3} parent=72 // pred_check
          %p713 = pneg %p712
        $region83: #{hgnn_forward.3} parent=72 // pred_check_branch
          %715 = sbr.rel (%p713) target = $region85
        $region84: #{hgnn_forward.3} parent=72 // pred_region
          %v716 = vld [vmem:[#allocation2] sm:$0xff]
          %v717 = vld [vmem:[#allocation2 + $0x8] sm:$0xff]
          %v718 = vld [vmem:[#allocation2 + $0x10] sm:$0xff]
          %v719 = vld [vmem:[#allocation2 + $0x18] sm:$0xff]
          %v720 = vld [vmem:[#allocation2 + $0x20] sm:$0xff]
          %v721 = vld [vmem:[#allocation2 + $0x28] sm:$0xff]
          %v722 = vld [vmem:[#allocation2 + $0x30] sm:$0xff]
          %v723 = vld [vmem:[#allocation2 + $0x38] sm:$0xff]
          %v724 = vld [vmem:[#allocation2 + $0x40] sm:$0xff]
          %v725 = vld [vmem:[#allocation2 + $0x48] sm:$0xff]
          %v726 = vld [vmem:[#allocation2 + $0x50] sm:$0xff]
          %v727 = vld [vmem:[#allocation2 + $0x58] sm:$0xff]
          %v728 = vld [vmem:[#allocation2 + $0x60] sm:$0xff]
          %v729 = vld [vmem:[#allocation2 + $0x68] sm:$0xff]
          %v730 = vld [vmem:[#allocation2 + $0x70] sm:$0xff]
          %v731 = vld [vmem:[#allocation2 + $0x78] sm:$0xff]
          %732 = vst [vmem:[%s340] sm:$0xff] %v716
          %733 = vst [vmem:[%s340 + $0x8] sm:$0xff] %v717
          %734 = vst [vmem:[%s340 + $0x10] sm:$0xff] %v718
          %735 = vst [vmem:[%s340 + $0x18] sm:$0xff] %v719
          %736 = vst [vmem:[%s340 + $0x20] sm:$0xff] %v720
          %737 = vst [vmem:[%s340 + $0x28] sm:$0xff] %v721
          %738 = vst [vmem:[%s340 + $0x30] sm:$0xff] %v722
          %739 = vst [vmem:[%s340 + $0x38] sm:$0xff] %v723
          %740 = vst [vmem:[%s340 + $0x40] sm:$0xff] %v724
          %741 = vst [vmem:[%s340 + $0x48] sm:$0xff] %v725
          %742 = vst [vmem:[%s340 + $0x50] sm:$0xff] %v726
          %743 = vst [vmem:[%s340 + $0x58] sm:$0xff] %v727
          %744 = vst [vmem:[%s340 + $0x60] sm:$0xff] %v728
          %745 = vst [vmem:[%s340 + $0x68] sm:$0xff] %v729
          %746 = vst [vmem:[%s340 + $0x70] sm:$0xff] %v730
          %747 = vst [vmem:[%s340 + $0x78] sm:$0xff] %v731
        $region85: #{hgnn_forward.3} parent=72 // pred_fallthru
          _
        %s748 = smul.u32 16, %s19
        %p749 = scmp.lt.s32.totalorder %s748, 47
        %s750 = scalar_select %p749, %s748, 47
        %s751 = smul.addr %s750, 8
        %s752 = scalar_lea.vmem %s4, %s751
        // Predicated region
        $region86: #{hgnn_forward.3} parent=72 // pred_check
          %p753 = pneg %p141
        $region87: #{hgnn_forward.3} parent=72 // pred_check_branch
          %755 = sbr.rel (%p753) target = $region89
        $region88: #{hgnn_forward.3} parent=72 // pred_region
          %s756 = smul.u32 16, %s19
        $region89: #{hgnn_forward.3} parent=72 // pred_fallthru
          _
      $region73: #{hgnn_forward.3} parent=5 // pred_fallthru
        _
      %p757 = scmp.le.s32.totalorder 2, %s10
      // Predicated region
      $region90: #{hgnn_forward.3} parent=5 // pred_check
        %p758 = pneg %p757
      $region91: #{hgnn_forward.3} parent=5 // pred_check_branch
        %760 = sbr.rel (%p758) target = $region93
      $region92: #{hgnn_forward.3} parent=5 // pred_region
        %s761 = ssub.s32 %s10, 2
        // Predicated region
        $region94: #{hgnn_forward.3} parent=92 // pred_check
          %p762 = pneg %p147
        $region95: #{hgnn_forward.3} parent=92 // pred_check_branch
          %764 = sbr.rel (%p762) target = $region97
        $region96: #{hgnn_forward.3} parent=92 // pred_region
          %s765 = smul.u32 16, %s21
          %p766 = scmp.lt.s32.totalorder %s765, 47
          %s767 = scalar_select %p766, %s765, 47
          %s768 = smul.addr %s767, 8
          %s769 = scalar_lea.vmem %s4, %s768
        $region97: #{hgnn_forward.3} parent=92 // pred_fallthru
          _
      $region93: #{hgnn_forward.3} parent=5 // pred_fallthru
        _
    $region6: #{hgnn_forward.3} parent=1 // loop_footer
      %s14 = sadd.s32 1, %s10
    $region7: #{hgnn_forward.3} parent=1 // loop_footer_branch
      %9 = sbr.rel target = $region3
    $region8: #{hgnn_forward.3} parent=1 // loop_exit
      _

</llo_original>
